<compile_context>
chip_gen: v7x
topology: tpu7x:2x2x1
jax: 0.10.0
libtpu: 0.0.40
codegen_flags: <defaults>
</compile_context>

<pallas_src>
import functools

import jax
import jax.numpy as jnp
from jax import lax
from jax.experimental import pallas as pl
from jax.experimental.pallas import tpu as pltpu


def _round_up(v, m):
    return ((v + m - 1) // m) * m


def _pack_cols(w2d, H, G, dup_z):
    """Pack a (rows, 3H) [r|z|n] matrix into (rows, G); optionally duplicate z into the
    last H columns (used to make the z-alignment roll direction-agnostic)."""
    out = jnp.pad(w2d, ((0, 0), (0, G - 3 * H)))
    if dup_z:
        out = out.at[:, G - H:].set(w2d[:, H:2 * H])
    return out


def _gru_kernel(x_ref, wih_ref, whh_ref, bih_ref, bhn_ref, out_ref, *,
                steps, hid, seq_len, z_shift, need_guard):
    """One (batch block, time chunk) grid step: unrolled recurrence, h carried in out_ref."""
    BB, Hc = out_ref.shape
    D = wih_ref.shape[0]
    G = wih_ref.shape[1]
    H = hid
    TC = steps

    ti = pl.program_id(1)

    @pl.when(ti == 0)
    def _init():                      # h0 = 0 (also resets per batch block)
        out_ref[...] = jnp.zeros_like(out_ref)

    xb = x_ref[...]                   # (BB, TC*D)  this chunk's inputs
    wih = wih_ref[...]                # (D, G)      packed [r|z|n(|z)]
    whh = whh_ref[...]                # (Hc, G)     rows >= H are zero
    bih = jnp.broadcast_to(bih_ref[...], (BB, G))   # b_ih + [b_hr, b_hz, 0] (hoisted)
    bhn = jnp.broadcast_to(bhn_ref[...], (BB, G))   # b_hn only, in the n columns (hoisted)

    h = out_ref[...]                  # (BB, Hc) hidden state carried across chunks

    for s in range(TC):               # fully unrolled; TC <= 16 bounds live ranges
        x_t = xb[:, s * D:(s + 1) * D]                                    # (BB, D)
        # Off-critical-path input projection (independent of h -> fills MXU slack).
        gi = jnp.dot(x_t, wih, preferred_element_type=jnp.float32) + bih  # (BB, G)
        # Serial path: single 128-wide recurrent MXU tile + gate math.
        gh = jnp.dot(h, whh, preferred_element_type=jnp.float32) + bhn    # (BB, G)
        a = gi + gh
        rz = jax.nn.sigmoid(a)                        # r @ [0:H), z @ [H:2H) (+ dup @ [G-H:G))
        r_at_n = pltpu.roll(rz, 2 * H, axis=1)        # r aligned with the n columns
        n_full = jnp.tanh(gi + r_at_n * gh)           # n @ [2H:3H)
        n0 = pltpu.roll(n_full, G - 2 * H, axis=1)    # n -> lanes [0:H)
        z0 = pltpu.roll(rz, z_shift, axis=1)          # z -> lanes [0:H)
        if G != Hc:
            n0 = n0[:, :Hc]
            z0 = z0[:, :Hc]
        h_new = n0 + z0 * (h - n0)                    # == (1-z)*n + z*h
        if need_guard:                                # skip zero-padded timesteps
            h_new = jnp.where(ti * TC + s < seq_len, h_new, h)
        h = h_new

    out_ref[...] = h                                  # lane-dense (BB, Hc) store / carry


def question_embedding_forward(x, params, *, num_hid):
    """x: (batch, seq, in_dim) -> (batch, num_hid). Single-layer unidirectional GRU."""
    w_ih_t, w_hh_t, b_ih, b_hh = params
    batch, seq, in_dim = x.shape
    H = num_hid

    if seq == 0:
        # TODO(synk): torch.nn.GRU's output[:, -1] would raise on an empty sequence;
        # we return the zero initial hidden state instead (harmless semantic deviation).
        return jnp.zeros((batch, H), x.dtype)

    f32 = jnp.float32
    G = _round_up(3 * H, 128)          # packed gate slab width
    Hc = _round_up(H, 128)             # hidden-carry lane width (contracting dim of W_hh)
    dup_z = G >= 4 * H                 # spare lanes available -> duplicate z (roll-safe)
    z_shift = H if dup_z else G - H

    BB = min(_round_up(batch, 8), 128)          # batch rows per block (sublane aligned)
    BP = _round_up(batch, BB)
    TC = min(_round_up(seq, 8), 16)             # timesteps per chunk (bounded unroll)
    seq_pad = _round_up(seq, TC)
    if (TC * in_dim) % 128 != 0:
        # x block's last dim must be a multiple of 128 (or the full dim): fall back to a
        # single whole-sequence chunk for awkward in_dim.  Not hit for in_dim=32.
        TC = seq_pad = _round_up(seq, 8)
    need_guard = seq_pad != seq

    # ---- parameter packing (wrapper-side, once) --------------------------------------
    wih_p = _pack_cols(w_ih_t.astype(f32), H, G, dup_z)              # (in_dim, G)
    whh_p = _pack_cols(w_hh_t.astype(f32), H, G, dup_z)              # (H, G)
    whh_p = jnp.pad(whh_p, ((0, Hc - H), (0, 0)))                    # (Hc, G), zero rows >= H
    b_comb = b_ih.astype(f32) + jnp.concatenate(
        [b_hh[:, :2 * H].astype(f32), jnp.zeros((1, H), f32)], axis=1)
    bih_p = _pack_cols(b_comb, H, G, dup_z)                          # (1, G)
    bhn_p = jnp.pad(b_hh[:, 2 * H:3 * H].astype(f32),
                    ((0, 0), (2 * H, G - 3 * H)))                    # (1, G), b_hn in n cols

    # ---- input prep: pad batch/seq, free collapse of trailing dims (no transpose copy) -
    x_p = jnp.pad(x.astype(f32), ((0, BP - batch), (0, seq_pad - seq), (0, 0)))
    x2 = x_p.reshape(BP, seq_pad * in_dim)

    kernel = functools.partial(_gru_kernel, steps=TC, hid=H, seq_len=seq,
                               z_shift=z_shift, need_guard=need_guard)

    grid = (BP // BB, seq_pad // TC)

    out = pl.pallas_call(
        kernel,
        out_shape=jax.ShapeDtypeStruct((BP, Hc), f32),
        grid_spec=pltpu.PrefetchScalarGridSpec(
            num_scalar_prefetch=0,
            grid=grid,
            in_specs=[
                pl.BlockSpec((BB, TC * in_dim), lambda bi, ti: (bi, ti)),  # x chunk
                pl.BlockSpec((in_dim, G), lambda bi, ti: (0, 0)),          # W_ih^T packed
                pl.BlockSpec((Hc, G), lambda bi, ti: (0, 0)),              # W_hh^T packed
                pl.BlockSpec((1, G), lambda bi, ti: (0, 0)),               # b_ih + b_hh[r,z]
                pl.BlockSpec((1, G), lambda bi, ti: (0, 0)),               # b_hh[n]
            ],
            out_specs=pl.BlockSpec((BB, Hc), lambda bi, ti: (bi, 0)),      # h carry / result
        ),
        compiler_params=pltpu.CompilerParams(
            dimension_semantics=("parallel", "arbitrary"),
            vmem_limit_bytes=32 * 1024 * 1024,
        ),
    )(x2, wih_p, whh_p, bih_p, bhn_p)

    return out[:batch, :H].astype(x.dtype)


def init_gru_params(key, in_dim, num_hid, dtype=jnp.float32):
    """PyTorch GRU param shapes (single layer, unidirectional), stored transposed:
    weight_ih (3H, in_dim) -> (in_dim, 3H); weight_hh (3H, H) -> (H, 3H); biases (1, 3H)."""
    k1, k2, k3, k4 = jax.random.split(key, 4)
    bound = 1.0 / jnp.sqrt(jnp.asarray(num_hid, dtype))
    w_ih_t = jax.random.uniform(k1, (in_dim, 3 * num_hid), dtype, -bound, bound)
    w_hh_t = jax.random.uniform(k2, (num_hid, 3 * num_hid), dtype, -bound, bound)
    b_ih = jax.random.uniform(k3, (1, 3 * num_hid), dtype, -bound, bound)
    b_hh = jax.random.uniform(k4, (1, 3 * num_hid), dtype, -bound, bound)
    return w_ih_t, w_hh_t, b_ih, b_hh


def gru_reference(x, params, *, num_hid):
    """Pure-JAX reference (lax.scan) mirroring torch.nn.GRU gate math."""
    w_ih_t, w_hh_t, b_ih, b_hh = params
    H = num_hid
    batch = x.shape[0]

    def step(h, x_t):
        gi = x_t @ w_ih_t + b_ih
        gh = h @ w_hh_t + b_hh
        i_r, i_z, i_n = gi[:, :H], gi[:, H:2 * H], gi[:, 2 * H:]
        h_r, h_z, h_n = gh[:, :H], gh[:, H:2 * H], gh[:, 2 * H:]
        r = jax.nn.sigmoid(i_r + h_r)
        z = jax.nn.sigmoid(i_z + h_z)
        n = jnp.tanh(i_n + r * h_n)
        return (1.0 - z) * n + z * h, None

    h0 = jnp.zeros((batch, H), x.dtype)
    h_last, _ = lax.scan(step, h0, jnp.transpose(x, (1, 0, 2)))
    return h_last


if __name__ == "__main__":
    # Module config: in_dim=32, num_hid=32, nlayers=1, bidirect=False, dropout=0.0, GRU.
    in_dim, num_hid = 32, 32
    batch, seq = 2, 8

    key = jax.random.PRNGKey(0)
    kx, kp = jax.random.split(key)
    x = jax.random.normal(kx, (batch, seq, in_dim), jnp.float32)
    params = init_gru_params(kp, in_dim, num_hid)

    out = question_embedding_forward(x, params, num_hid=num_hid)
    out = jax.block_until_ready(out)

    ref = gru_reference(x, params, num_hid=num_hid)
    assert out.shape == (batch, num_hid)
    assert jnp.allclose(out, ref, atol=1e-5, rtol=1e-5), "mismatch vs pure-JAX GRU reference"

    print("KERNEL_OK")
</pallas_src>

<mosaic_0001>
module attributes {stable_mosaic.version = 11 : i64} {
  func.func @_gru_kernel(%arg0: i32, %arg1: i32, %arg2: memref<8x256xf32, #tpu.memory_space<vmem>>, %arg3: memref<32x128xf32, #tpu.memory_space<vmem>>, %arg4: memref<128x128xf32, #tpu.memory_space<vmem>>, %arg5: memref<1x128xf32, #tpu.memory_space<vmem>>, %arg6: memref<1x128xf32, #tpu.memory_space<vmem>>, %arg7: memref<8x128xf32, #tpu.memory_space<vmem>>) attributes {dimension_semantics = [#tpu.dimension_semantics<parallel>, #tpu.dimension_semantics<arbitrary>], iteration_bounds = array<i64: 1, 1>, scalar_prefetch = 0 : i64, scratch_operands = 0 : i64, tpu.core_type = #tpu.core_type<tc>, window_params = [{transform_indices = @transform_0, window_bounds = array<i64: 8, 256>}, {pipeline_mode = #tpu.pipeline_mode<synchronous>, transform_indices = @transform_1, window_bounds = array<i64: 32, 128>}, {pipeline_mode = #tpu.pipeline_mode<synchronous>, transform_indices = @transform_2, window_bounds = array<i64: 128, 128>}, {pipeline_mode = #tpu.pipeline_mode<synchronous>, transform_indices = @transform_3, window_bounds = array<i64: 1, 128>}, {pipeline_mode = #tpu.pipeline_mode<synchronous>, transform_indices = @transform_4, window_bounds = array<i64: 1, 128>}, {transform_indices = @transform_5, window_bounds = array<i64: 8, 128>}]} {
    %c0_i32 = arith.constant 0 : i32
    %0 = arith.cmpi eq, %arg1, %c0_i32 : i32
    %1 = arith.extui %0 : i1 to i32
    %c0_i32_0 = arith.constant 0 : i32
    %2 = arith.cmpi ne, %1, %c0_i32_0 : i32
    scf.if %2 {
      %cst_59 = arith.constant 0.000000e+00 : f32
      %174 = vector.broadcast %cst_59 : f32 to vector<8x128xf32>
      %c0_60 = arith.constant 0 : index
      %c0_61 = arith.constant 0 : index
      %175 = vector.load %arg7[%c0_60, %c0_61] : memref<8x128xf32, #tpu.memory_space<vmem>>, vector<8x128xf32>
      tpu.vector_store %arg7[%c0_60, %c0_61], %174 {strides = array<i32>} : memref<8x128xf32, #tpu.memory_space<vmem>>, vector<8x128xf32>,
    } else {
    }
    %c0 = arith.constant 0 : index
    %c0_1 = arith.constant 0 : index
    %3 = vector.load %arg2[%c0, %c0_1] : memref<8x256xf32, #tpu.memory_space<vmem>>, vector<8x256xf32>
    %c0_2 = arith.constant 0 : index
    %c0_3 = arith.constant 0 : index
    %4 = vector.load %arg3[%c0_2, %c0_3] : memref<32x128xf32, #tpu.memory_space<vmem>>, vector<32x128xf32>
    %c0_4 = arith.constant 0 : index
    %c0_5 = arith.constant 0 : index
    %5 = vector.load %arg4[%c0_4, %c0_5] : memref<128x128xf32, #tpu.memory_space<vmem>>, vector<128x128xf32>
    %c0_6 = arith.constant 0 : index
    %c0_7 = arith.constant 0 : index
    %6 = vector.load %arg5[%c0_6, %c0_7] : memref<1x128xf32, #tpu.memory_space<vmem>>, vector<1x128xf32>
    %7 = vector.shape_cast %6 : vector<1x128xf32> to vector<1x128xf32>
    %8 = vector.broadcast %7 : vector<1x128xf32> to vector<8x128xf32>
    %c0_8 = arith.constant 0 : index
    %c0_9 = arith.constant 0 : index
    %9 = vector.load %arg6[%c0_8, %c0_9] : memref<1x128xf32, #tpu.memory_space<vmem>>, vector<1x128xf32>
    %10 = vector.shape_cast %9 : vector<1x128xf32> to vector<1x128xf32>
    %11 = vector.broadcast %10 : vector<1x128xf32> to vector<8x128xf32>
    %c0_10 = arith.constant 0 : index
    %c0_11 = arith.constant 0 : index
    %12 = vector.load %arg7[%c0_10, %c0_11] : memref<8x128xf32, #tpu.memory_space<vmem>>, vector<8x128xf32>
    %13 = vector.extract_strided_slice %3 {offsets = [0, 0], sizes = [8, 32], strides = [1, 1]} : vector<8x256xf32> to vector<8x32xf32>
    %cst = arith.constant dense<0.000000e+00> : vector<8x128xf32>
    %14 = tpu.matmul %13, %4, %cst {dimension_numbers = #tpu.dot_dimension_numbers<[1], [0], [0], [1], [0, 0, 1, 1], [], []>} : vector<8x32xf32>, vector<32x128xf32>, vector<8x128xf32> -> vector<8x128xf32>
    %15 = arith.addf %14, %8 : vector<8x128xf32>
    %cst_12 = arith.constant dense<0.000000e+00> : vector<8x128xf32>
    %16 = tpu.matmul %12, %5, %cst_12 {dimension_numbers = #tpu.dot_dimension_numbers<[1], [0], [0], [1], [0, 0, 1, 1], [], []>} : vector<8x128xf32>, vector<128x128xf32>, vector<8x128xf32> -> vector<8x128xf32>
    %17 = arith.addf %16, %11 : vector<8x128xf32>
    %18 = arith.addf %15, %17 : vector<8x128xf32>
    %19 = arith.negf %18 : vector<8x128xf32>
    %20 = math.exp %19 : vector<8x128xf32>
    %cst_13 = arith.constant 1.000000e+00 : f32
    %21 = vector.broadcast %cst_13 : f32 to vector<8x128xf32>
    %22 = arith.addf %21, %20 : vector<8x128xf32>
    %23 = arith.divf %21, %22 : vector<8x128xf32>
    %c64_i32 = arith.constant 64 : i32
    %24 = tpu.dynamic_rotate %23 by %c64_i32 dim 1 : vector<8x128xf32>, i32 -> vector<8x128xf32>
    %25 = arith.mulf %24, %17 : vector<8x128xf32>
    %26 = arith.addf %15, %25 : vector<8x128xf32>
    %27 = math.tanh %26 : vector<8x128xf32>
    %c64_i32_14 = arith.constant 64 : i32
    %28 = tpu.dynamic_rotate %27 by %c64_i32_14 dim 1 : vector<8x128xf32>, i32 -> vector<8x128xf32>
    %c32_i32 = arith.constant 32 : i32
    %29 = tpu.dynamic_rotate %23 by %c32_i32 dim 1 : vector<8x128xf32>, i32 -> vector<8x128xf32>
    %30 = arith.subf %12, %28 : vector<8x128xf32>
    %31 = arith.mulf %29, %30 : vector<8x128xf32>
    %32 = arith.addf %28, %31 : vector<8x128xf32>
    %33 = vector.extract_strided_slice %3 {offsets = [0, 32], sizes = [8, 32], strides = [1, 1]} : vector<8x256xf32> to vector<8x32xf32>
    %cst_15 = arith.constant dense<0.000000e+00> : vector<8x128xf32>
    %34 = tpu.matmul %33, %4, %cst_15 {dimension_numbers = #tpu.dot_dimension_numbers<[1], [0], [0], [1], [0, 0, 1, 1], [], []>} : vector<8x32xf32>, vector<32x128xf32>, vector<8x128xf32> -> vector<8x128xf32>
    %35 = arith.addf %34, %8 : vector<8x128xf32>
    %cst_16 = arith.constant dense<0.000000e+00> : vector<8x128xf32>
    %36 = tpu.matmul %32, %5, %cst_16 {dimension_numbers = #tpu.dot_dimension_numbers<[1], [0], [0], [1], [0, 0, 1, 1], [], []>} : vector<8x128xf32>, vector<128x128xf32>, vector<8x128xf32> -> vector<8x128xf32>
    %37 = arith.addf %36, %11 : vector<8x128xf32>
    %38 = arith.addf %35, %37 : vector<8x128xf32>
    %39 = arith.negf %38 : vector<8x128xf32>
    %40 = math.exp %39 : vector<8x128xf32>
    %cst_17 = arith.constant 1.000000e+00 : f32
    %41 = vector.broadcast %cst_17 : f32 to vector<8x128xf32>
    %42 = arith.addf %41, %40 : vector<8x128xf32>
    %43 = arith.divf %41, %42 : vector<8x128xf32>
    %c64_i32_18 = arith.constant 64 : i32
    %44 = tpu.dynamic_rotate %43 by %c64_i32_18 dim 1 : vector<8x128xf32>, i32 -> vector<8x128xf32>
    %45 = arith.mulf %44, %37 : vector<8x128xf32>
    %46 = arith.addf %35, %45 : vector<8x128xf32>
    %47 = math.tanh %46 : vector<8x128xf32>
    %c64_i32_19 = arith.constant 64 : i32
    %48 = tpu.dynamic_rotate %47 by %c64_i32_19 dim 1 : vector<8x128xf32>, i32 -> vector<8x128xf32>
    %c32_i32_20 = arith.constant 32 : i32
    %49 = tpu.dynamic_rotate %43 by %c32_i32_20 dim 1 : vector<8x128xf32>, i32 -> vector<8x128xf32>
    %50 = arith.subf %32, %48 : vector<8x128xf32>
    %51 = arith.mulf %49, %50 : vector<8x128xf32>
    %52 = arith.addf %48, %51 : vector<8x128xf32>
    %53 = vector.extract_strided_slice %3 {offsets = [0, 64], sizes = [8, 32], strides = [1, 1]} : vector<8x256xf32> to vector<8x32xf32>
    %cst_21 = arith.constant dense<0.000000e+00> : vector<8x128xf32>
    %54 = tpu.matmul %53, %4, %cst_21 {dimension_numbers = #tpu.dot_dimension_numbers<[1], [0], [0], [1], [0, 0, 1, 1], [], []>} : vector<8x32xf32>, vector<32x128xf32>, vector<8x128xf32> -> vector<8x128xf32>
    %55 = arith.addf %54, %8 : vector<8x128xf32>
    %cst_22 = arith.constant dense<0.000000e+00> : vector<8x128xf32>
    %56 = tpu.matmul %52, %5, %cst_22 {dimension_numbers = #tpu.dot_dimension_numbers<[1], [0], [0], [1], [0, 0, 1, 1], [], []>} : vector<8x128xf32>, vector<128x128xf32>, vector<8x128xf32> -> vector<8x128xf32>
    %57 = arith.addf %56, %11 : vector<8x128xf32>
    %58 = arith.addf %55, %57 : vector<8x128xf32>
    %59 = arith.negf %58 : vector<8x128xf32>
    %60 = math.exp %59 : vector<8x128xf32>
    %cst_23 = arith.constant 1.000000e+00 : f32
    %61 = vector.broadcast %cst_23 : f32 to vector<8x128xf32>
    %62 = arith.addf %61, %60 : vector<8x128xf32>
    %63 = arith.divf %61, %62 : vector<8x128xf32>
    %c64_i32_24 = arith.constant 64 : i32
    %64 = tpu.dynamic_rotate %63 by %c64_i32_24 dim 1 : vector<8x128xf32>, i32 -> vector<8x128xf32>
    %65 = arith.mulf %64, %57 : vector<8x128xf32>
    %66 = arith.addf %55, %65 : vector<8x128xf32>
    %67 = math.tanh %66 : vector<8x128xf32>
    %c64_i32_25 = arith.constant 64 : i32
    %68 = tpu.dynamic_rotate %67 by %c64_i32_25 dim 1 : vector<8x128xf32>, i32 -> vector<8x128xf32>
    %c32_i32_26 = arith.constant 32 : i32
    %69 = tpu.dynamic_rotate %63 by %c32_i32_26 dim 1 : vector<8x128xf32>, i32 -> vector<8x128xf32>
    %70 = arith.subf %52, %68 : vector<8x128xf32>
    %71 = arith.mulf %69, %70 : vector<8x128xf32>
    %72 = arith.addf %68, %71 : vector<8x128xf32>
    %73 = vector.extract_strided_slice %3 {offsets = [0, 96], sizes = [8, 32], strides = [1, 1]} : vector<8x256xf32> to vector<8x32xf32>
    %cst_27 = arith.constant dense<0.000000e+00> : vector<8x128xf32>
    %74 = tpu.matmul %73, %4, %cst_27 {dimension_numbers = #tpu.dot_dimension_numbers<[1], [0], [0], [1], [0, 0, 1, 1], [], []>} : vector<8x32xf32>, vector<32x128xf32>, vector<8x128xf32> -> vector<8x128xf32>
    %75 = arith.addf %74, %8 : vector<8x128xf32>
    %cst_28 = arith.constant dense<0.000000e+00> : vector<8x128xf32>
    %76 = tpu.matmul %72, %5, %cst_28 {dimension_numbers = #tpu.dot_dimension_numbers<[1], [0], [0], [1], [0, 0, 1, 1], [], []>} : vector<8x128xf32>, vector<128x128xf32>, vector<8x128xf32> -> vector<8x128xf32>
    %77 = arith.addf %76, %11 : vector<8x128xf32>
    %78 = arith.addf %75, %77 : vector<8x128xf32>
    %79 = arith.negf %78 : vector<8x128xf32>
    %80 = math.exp %79 : vector<8x128xf32>
    %cst_29 = arith.constant 1.000000e+00 : f32
    %81 = vector.broadcast %cst_29 : f32 to vector<8x128xf32>
    %82 = arith.addf %81, %80 : vector<8x128xf32>
    %83 = arith.divf %81, %82 : vector<8x128xf32>
    %c64_i32_30 = arith.constant 64 : i32
    %84 = tpu.dynamic_rotate %83 by %c64_i32_30 dim 1 : vector<8x128xf32>, i32 -> vector<8x128xf32>
    %85 = arith.mulf %84, %77 : vector<8x128xf32>
    %86 = arith.addf %75, %85 : vector<8x128xf32>
    %87 = math.tanh %86 : vector<8x128xf32>
    %c64_i32_31 = arith.constant 64 : i32
    %88 = tpu.dynamic_rotate %87 by %c64_i32_31 dim 1 : vector<8x128xf32>, i32 -> vector<8x128xf32>
    %c32_i32_32 = arith.constant 32 : i32
    %89 = tpu.dynamic_rotate %83 by %c32_i32_32 dim 1 : vector<8x128xf32>, i32 -> vector<8x128xf32>
    %90 = arith.subf %72, %88 : vector<8x128xf32>
    %91 = arith.mulf %89, %90 : vector<8x128xf32>
    %92 = arith.addf %88, %91 : vector<8x128xf32>
    %93 = vector.extract_strided_slice %3 {offsets = [0, 128], sizes = [8, 32], strides = [1, 1]} : vector<8x256xf32> to vector<8x32xf32>
    %cst_33 = arith.constant dense<0.000000e+00> : vector<8x128xf32>
    %94 = tpu.matmul %93, %4, %cst_33 {dimension_numbers = #tpu.dot_dimension_numbers<[1], [0], [0], [1], [0, 0, 1, 1], [], []>} : vector<8x32xf32>, vector<32x128xf32>, vector<8x128xf32> -> vector<8x128xf32>
    %95 = arith.addf %94, %8 : vector<8x128xf32>
    %cst_34 = arith.constant dense<0.000000e+00> : vector<8x128xf32>
    %96 = tpu.matmul %92, %5, %cst_34 {dimension_numbers = #tpu.dot_dimension_numbers<[1], [0], [0], [1], [0, 0, 1, 1], [], []>} : vector<8x128xf32>, vector<128x128xf32>, vector<8x128xf32> -> vector<8x128xf32>
    %97 = arith.addf %96, %11 : vector<8x128xf32>
    %98 = arith.addf %95, %97 : vector<8x128xf32>
    %99 = arith.negf %98 : vector<8x128xf32>
    %100 = math.exp %99 : vector<8x128xf32>
    %cst_35 = arith.constant 1.000000e+00 : f32
    %101 = vector.broadcast %cst_35 : f32 to vector<8x128xf32>
    %102 = arith.addf %101, %100 : vector<8x128xf32>
    %103 = arith.divf %101, %102 : vector<8x128xf32>
    %c64_i32_36 = arith.constant 64 : i32
    %104 = tpu.dynamic_rotate %103 by %c64_i32_36 dim 1 : vector<8x128xf32>, i32 -> vector<8x128xf32>
    %105 = arith.mulf %104, %97 : vector<8x128xf32>
    %106 = arith.addf %95, %105 : vector<8x128xf32>
    %107 = math.tanh %106 : vector<8x128xf32>
    %c64_i32_37 = arith.constant 64 : i32
    %108 = tpu.dynamic_rotate %107 by %c64_i32_37 dim 1 : vector<8x128xf32>, i32 -> vector<8x128xf32>
    %c32_i32_38 = arith.constant 32 : i32
    %109 = tpu.dynamic_rotate %103 by %c32_i32_38 dim 1 : vector<8x128xf32>, i32 -> vector<8x128xf32>
    %110 = arith.subf %92, %108 : vector<8x128xf32>
    %111 = arith.mulf %109, %110 : vector<8x128xf32>
    %112 = arith.addf %108, %111 : vector<8x128xf32>
    %113 = vector.extract_strided_slice %3 {offsets = [0, 160], sizes = [8, 32], strides = [1, 1]} : vector<8x256xf32> to vector<8x32xf32>
    %cst_39 = arith.constant dense<0.000000e+00> : vector<8x128xf32>
    %114 = tpu.matmul %113, %4, %cst_39 {dimension_numbers = #tpu.dot_dimension_numbers<[1], [0], [0], [1], [0, 0, 1, 1], [], []>} : vector<8x32xf32>, vector<32x128xf32>, vector<8x128xf32> -> vector<8x128xf32>
    %115 = arith.addf %114, %8 : vector<8x128xf32>
    %cst_40 = arith.constant dense<0.000000e+00> : vector<8x128xf32>
    %116 = tpu.matmul %112, %5, %cst_40 {dimension_numbers = #tpu.dot_dimension_numbers<[1], [0], [0], [1], [0, 0, 1, 1], [], []>} : vector<8x128xf32>, vector<128x128xf32>, vector<8x128xf32> -> vector<8x128xf32>
    %117 = arith.addf %116, %11 : vector<8x128xf32>
    %118 = arith.addf %115, %117 : vector<8x128xf32>
    %119 = arith.negf %118 : vector<8x128xf32>
    %120 = math.exp %119 : vector<8x128xf32>
    %cst_41 = arith.constant 1.000000e+00 : f32
    %121 = vector.broadcast %cst_41 : f32 to vector<8x128xf32>
    %122 = arith.addf %121, %120 : vector<8x128xf32>
    %123 = arith.divf %121, %122 : vector<8x128xf32>
    %c64_i32_42 = arith.constant 64 : i32
    %124 = tpu.dynamic_rotate %123 by %c64_i32_42 dim 1 : vector<8x128xf32>, i32 -> vector<8x128xf32>
    %125 = arith.mulf %124, %117 : vector<8x128xf32>
    %126 = arith.addf %115, %125 : vector<8x128xf32>
    %127 = math.tanh %126 : vector<8x128xf32>
    %c64_i32_43 = arith.constant 64 : i32
    %128 = tpu.dynamic_rotate %127 by %c64_i32_43 dim 1 : vector<8x128xf32>, i32 -> vector<8x128xf32>
    %c32_i32_44 = arith.constant 32 : i32
    %129 = tpu.dynamic_rotate %123 by %c32_i32_44 dim 1 : vector<8x128xf32>, i32 -> vector<8x128xf32>
    %130 = arith.subf %112, %128 : vector<8x128xf32>
    %131 = arith.mulf %129, %130 : vector<8x128xf32>
    %132 = arith.addf %128, %131 : vector<8x128xf32>
    %133 = vector.extract_strided_slice %3 {offsets = [0, 192], sizes = [8, 32], strides = [1, 1]} : vector<8x256xf32> to vector<8x32xf32>
    %cst_45 = arith.constant dense<0.000000e+00> : vector<8x128xf32>
    %134 = tpu.matmul %133, %4, %cst_45 {dimension_numbers = #tpu.dot_dimension_numbers<[1], [0], [0], [1], [0, 0, 1, 1], [], []>} : vector<8x32xf32>, vector<32x128xf32>, vector<8x128xf32> -> vector<8x128xf32>
    %135 = arith.addf %134, %8 : vector<8x128xf32>
    %cst_46 = arith.constant dense<0.000000e+00> : vector<8x128xf32>
    %136 = tpu.matmul %132, %5, %cst_46 {dimension_numbers = #tpu.dot_dimension_numbers<[1], [0], [0], [1], [0, 0, 1, 1], [], []>} : vector<8x128xf32>, vector<128x128xf32>, vector<8x128xf32> -> vector<8x128xf32>
    %137 = arith.addf %136, %11 : vector<8x128xf32>
    %138 = arith.addf %135, %137 : vector<8x128xf32>
    %139 = arith.negf %138 : vector<8x128xf32>
    %140 = math.exp %139 : vector<8x128xf32>
    %cst_47 = arith.constant 1.000000e+00 : f32
    %141 = vector.broadcast %cst_47 : f32 to vector<8x128xf32>
    %142 = arith.addf %141, %140 : vector<8x128xf32>
    %143 = arith.divf %141, %142 : vector<8x128xf32>
    %c64_i32_48 = arith.constant 64 : i32
    %144 = tpu.dynamic_rotate %143 by %c64_i32_48 dim 1 : vector<8x128xf32>, i32 -> vector<8x128xf32>
    %145 = arith.mulf %144, %137 : vector<8x128xf32>
    %146 = arith.addf %135, %145 : vector<8x128xf32>
    %147 = math.tanh %146 : vector<8x128xf32>
    %c64_i32_49 = arith.constant 64 : i32
    %148 = tpu.dynamic_rotate %147 by %c64_i32_49 dim 1 : vector<8x128xf32>, i32 -> vector<8x128xf32>
    %c32_i32_50 = arith.constant 32 : i32
    %149 = tpu.dynamic_rotate %143 by %c32_i32_50 dim 1 : vector<8x128xf32>, i32 -> vector<8x128xf32>
    %150 = arith.subf %132, %148 : vector<8x128xf32>
    %151 = arith.mulf %149, %150 : vector<8x128xf32>
    %152 = arith.addf %148, %151 : vector<8x128xf32>
    %153 = vector.extract_strided_slice %3 {offsets = [0, 224], sizes = [8, 32], strides = [1, 1]} : vector<8x256xf32> to vector<8x32xf32>
    %cst_51 = arith.constant dense<0.000000e+00> : vector<8x128xf32>
    %154 = tpu.matmul %153, %4, %cst_51 {dimension_numbers = #tpu.dot_dimension_numbers<[1], [0], [0], [1], [0, 0, 1, 1], [], []>} : vector<8x32xf32>, vector<32x128xf32>, vector<8x128xf32> -> vector<8x128xf32>
    %155 = arith.addf %154, %8 : vector<8x128xf32>
    %cst_52 = arith.constant dense<0.000000e+00> : vector<8x128xf32>
    %156 = tpu.matmul %152, %5, %cst_52 {dimension_numbers = #tpu.dot_dimension_numbers<[1], [0], [0], [1], [0, 0, 1, 1], [], []>} : vector<8x128xf32>, vector<128x128xf32>, vector<8x128xf32> -> vector<8x128xf32>
    %157 = arith.addf %156, %11 : vector<8x128xf32>
    %158 = arith.addf %155, %157 : vector<8x128xf32>
    %159 = arith.negf %158 : vector<8x128xf32>
    %160 = math.exp %159 : vector<8x128xf32>
    %cst_53 = arith.constant 1.000000e+00 : f32
    %161 = vector.broadcast %cst_53 : f32 to vector<8x128xf32>
    %162 = arith.addf %161, %160 : vector<8x128xf32>
    %163 = arith.divf %161, %162 : vector<8x128xf32>
    %c64_i32_54 = arith.constant 64 : i32
    %164 = tpu.dynamic_rotate %163 by %c64_i32_54 dim 1 : vector<8x128xf32>, i32 -> vector<8x128xf32>
    %165 = arith.mulf %164, %157 : vector<8x128xf32>
    %166 = arith.addf %155, %165 : vector<8x128xf32>
    %167 = math.tanh %166 : vector<8x128xf32>
    %c64_i32_55 = arith.constant 64 : i32
    %168 = tpu.dynamic_rotate %167 by %c64_i32_55 dim 1 : vector<8x128xf32>, i32 -> vector<8x128xf32>
    %c32_i32_56 = arith.constant 32 : i32
    %169 = tpu.dynamic_rotate %163 by %c32_i32_56 dim 1 : vector<8x128xf32>, i32 -> vector<8x128xf32>
    %170 = arith.subf %152, %168 : vector<8x128xf32>
    %171 = arith.mulf %169, %170 : vector<8x128xf32>
    %172 = arith.addf %168, %171 : vector<8x128xf32>
    %c0_57 = arith.constant 0 : index
    %c0_58 = arith.constant 0 : index
    %173 = vector.load %arg7[%c0_57, %c0_58] : memref<8x128xf32, #tpu.memory_space<vmem>>, vector<8x128xf32>
    tpu.vector_store %arg7[%c0_57, %c0_58], %172 {strides = array<i32>} : memref<8x128xf32, #tpu.memory_space<vmem>>, vector<8x128xf32>,
    return
  }
  func.func @transform_0(%arg0: i32, %arg1: i32) -> (i32, i32) {
    %c0_i32 = arith.constant 0 : i32
    return %arg0, %arg1 : i32, i32
  }
  func.func @transform_1(%arg0: i32, %arg1: i32) -> (i32, i32) {
    %c0_i32 = arith.constant 0 : i32
    %c0_i32_0 = arith.constant 0 : i32
    %c0_i32_1 = arith.constant 0 : i32
    return %c0_i32, %c0_i32_0 : i32, i32
  }
  func.func @transform_2(%arg0: i32, %arg1: i32) -> (i32, i32) {
    %c0_i32 = arith.constant 0 : i32
    %c0_i32_0 = arith.constant 0 : i32
    %c0_i32_1 = arith.constant 0 : i32
    return %c0_i32, %c0_i32_0 : i32, i32
  }
  func.func @transform_3(%arg0: i32, %arg1: i32) -> (i32, i32) {
    %c0_i32 = arith.constant 0 : i32
    %c0_i32_0 = arith.constant 0 : i32
    %c0_i32_1 = arith.constant 0 : i32
    return %c0_i32, %c0_i32_0 : i32, i32
  }
  func.func @transform_4(%arg0: i32, %arg1: i32) -> (i32, i32) {
    %c0_i32 = arith.constant 0 : i32
    %c0_i32_0 = arith.constant 0 : i32
    %c0_i32_1 = arith.constant 0 : i32
    return %c0_i32, %c0_i32_0 : i32, i32
  }
  func.func @transform_5(%arg0: i32, %arg1: i32) -> (i32, i32) {
    %c0_i32 = arith.constant 0 : i32
    %c0_i32_0 = arith.constant 0 : i32
    return %arg0, %c0_i32 : i32, i32
  }
}

</mosaic_0001>

<llo_original>
// kernel: tpu_custom_call.1
$region0: #{tpu_custom_call.1}
  #allocation0 [shape = 'u32[]', space=smem, size = 0x4, offset = 0x4, fixed_abs, tag = 'smem constant byte address 0x4 - core index']
  #allocation1 [shape = 'u32[144,128]{1,0:T(1,128)}', space=vmem, size = 0x12000, scoped, tag = 'internal scratch']
  %s0 = inlined_call_operand.hbm [shape: f32[8,256], index: 0, kind: input, shape index: {}]
  %s1 = inlined_call_operand.hbm [shape: f32[32,128], index: 1, kind: input, shape index: {}]
  %s2 = inlined_call_operand.hbm [shape: f32[128,128], index: 2, kind: input, shape index: {}]
  %s3 = inlined_call_operand.vmem [shape: f32[1,128], index: 3, kind: input, shape index: {}]
  %s4 = inlined_call_operand.vmem [shape: f32[1,128], index: 4, kind: input, shape index: {}]
  %s5 = inlined_call_operand.hbm [shape: f32[8,128], index: 5, kind: output, shape index: {}]
  %s6 = sld [smem:[#allocation0]]
  $region46: #{tpu_custom_call.1} parent=0
    _
  %s8 = ssub.s32 1, %s6
  %s9 = scalar_select 0, %s8, %s6
  $region1: #{tpu_custom_call.1} parent=0
    #allocation2 [shape = 'u8[8192]{0}', space=vmem, size = 0x2000, scoped, tag = 'input window, operand 0, single buffered']
    #allocation3 [shape = 's32[1]{0}', space=sflag, size = 0x4, scoped, tag = 'scoped memory for tpu_custom_call.1']
    #allocation4 [shape = 's32[1]{0}', space=sflag, size = 0x4, scoped, tag = 'scoped memory for tpu_custom_call.1']
    #allocation5 [shape = 'u8[16384]{0}', space=vmem, size = 0x4000, scoped, tag = 'input window, operand 1, single buffered']
    #allocation6 [shape = 's32[1]{0}', space=sflag, size = 0x4, scoped, tag = 'scoped memory for tpu_custom_call.1']
    #allocation7 [shape = 'u8[65536]{0}', space=vmem, size = 0x10000, scoped, tag = 'input window, operand 2, single buffered']
    #allocation8 [shape = 'u8[4096]{0}', space=vmem, size = 0x1000, scoped, tag = 'output window, operand 0, single buffered']
    %10 = vsyncpa [#allocation3], 0
    %11 = vsyncpa [#allocation6], 0
    %12 = vsyncpa [#allocation4], 0
    // Predicated region
    $region2: #{tpu_custom_call.1} parent=1 // pred_check
      _
    $region3: #{tpu_custom_call.1} parent=1 // pred_check_branch
      %14 = sbr.rel (0) target = $region5
    $region4: #{tpu_custom_call.1} parent=1 // pred_region
      %s16 = ssub.s32 256, 256
      %17 = vsyncadd [#allocation3], %s16
      %s19 = sshll.u32 [#allocation2], 4
      %s20 = int_to_ptr.vmem [resolvable:$true] %s19
      %22 = dma.hbm_to_vmem [thread:$0]  %s0, 256, %s20, [#allocation3]
    $region5: #{tpu_custom_call.1} parent=1 // pred_fallthru
      _
    // Predicated region
    $region6: #{tpu_custom_call.1} parent=1 // pred_check
      _
    $region7: #{tpu_custom_call.1} parent=1 // pred_check_branch
      %24 = sbr.rel (0) target = $region9
    $region8: #{tpu_custom_call.1} parent=1 // pred_region
      %s26 = ssub.s32 512, 512
      %27 = vsyncadd [#allocation6], %s26
      %s28 = sshll.u32 [#allocation5], 4
      %s29 = int_to_ptr.vmem [resolvable:$true] %s28
      %34 = dma.hbm_to_vmem [thread:$0]  %s1, 512, %s29, [#allocation6], 128, 128, 8
    $region9: #{tpu_custom_call.1} parent=1 // pred_fallthru
      _
    // Predicated region
    $region10: #{tpu_custom_call.1} parent=1 // pred_check
      _
    $region11: #{tpu_custom_call.1} parent=1 // pred_check_branch
      %36 = sbr.rel (0) target = $region13
    $region12: #{tpu_custom_call.1} parent=1 // pred_region
      %s38 = ssub.s32 2048, 2048
      %39 = vsyncadd [#allocation6], %s38
      %s40 = sshll.u32 [#allocation7], 4
      %s41 = int_to_ptr.vmem [resolvable:$true] %s40
      %46 = dma.hbm_to_vmem [thread:$0]  %s2, 2048, %s41, [#allocation6], 128, 128, 8
    $region13: #{tpu_custom_call.1} parent=1 // pred_fallthru
      _
    // Predicated region
    $region14: #{tpu_custom_call.1} parent=1 // pred_check
      _
    $region15: #{tpu_custom_call.1} parent=1 // pred_check_branch
      %48 = sbr.rel (0) target = $region17
    $region16: #{tpu_custom_call.1} parent=1 // pred_region
      _
    $region17: #{tpu_custom_call.1} parent=1 // pred_fallthru
      _
    // Predicated region
    $region18: #{tpu_custom_call.1} parent=1 // pred_check
      _
    $region19: #{tpu_custom_call.1} parent=1 // pred_check_branch
      %50 = sbr.rel (0) target = $region21
    $region20: #{tpu_custom_call.1} parent=1 // pred_region
      _
    $region21: #{tpu_custom_call.1} parent=1 // pred_fallthru
      _
    // Predicated region
    $region22: #{tpu_custom_call.1} parent=1 // pred_check
      _
    $region23: #{tpu_custom_call.1} parent=1 // pred_check_branch
      %52 = sbr.rel (0) target = $region25
    $region24: #{tpu_custom_call.1} parent=1 // pred_region
      %53 = dma.done [#allocation3], 256
    $region25: #{tpu_custom_call.1} parent=1 // pred_fallthru
      _
    // Predicated region
    $region26: #{tpu_custom_call.1} parent=1 // pred_check
      _
    $region27: #{tpu_custom_call.1} parent=1 // pred_check_branch
      %55 = sbr.rel (0) target = $region29
    $region28: #{tpu_custom_call.1} parent=1 // pred_region
      %56 = dma.done [#allocation6], 512
    $region29: #{tpu_custom_call.1} parent=1 // pred_fallthru
      _
    // Predicated region
    $region30: #{tpu_custom_call.1} parent=1 // pred_check
      _
    $region31: #{tpu_custom_call.1} parent=1 // pred_check_branch
      %58 = sbr.rel (0) target = $region33
    $region32: #{tpu_custom_call.1} parent=1 // pred_region
      %59 = dma.done [#allocation6], 2048
    $region33: #{tpu_custom_call.1} parent=1 // pred_fallthru
      _
    %p60 = scmp.eq.s32.totalorder 0, 0
    // Predicated region
    $region34: #{tpu_custom_call.1} parent=1 // pred_check
      %p61 = pneg %p60
    $region35: #{tpu_custom_call.1} parent=1 // pred_check_branch
      %63 = sbr.rel (%p61) target = $region37
    $region36: #{tpu_custom_call.1} parent=1 // pred_region
      %64 = vst [vmem:[#allocation8] sm:$0xff] 0.0
    $region37: #{tpu_custom_call.1} parent=1 // pred_fallthru
      _
    %v65 = vld [vmem:[#allocation2] sm:$0xff]
    %v66 = vld [vmem:[#allocation2 + $0x8] sm:$0xff]
    %v67 = vld [vmem:[#allocation5] sm:$0xff]
    %v68 = vld [vmem:[#allocation5 + $0x8] sm:$0xff]
    %v69 = vld [vmem:[#allocation5 + $0x10] sm:$0xff]
    %v70 = vld [vmem:[#allocation5 + $0x18] sm:$0xff]
    %v71 = vld [vmem:[#allocation7] sm:$0xff]
    %v72 = vld [vmem:[#allocation7 + $0x8] sm:$0xff]
    %v73 = vld [vmem:[#allocation7 + $0x10] sm:$0xff]
    %v74 = vld [vmem:[#allocation7 + $0x18] sm:$0xff]
    %v75 = vld [vmem:[#allocation7 + $0x20] sm:$0xff]
    %v76 = vld [vmem:[#allocation7 + $0x28] sm:$0xff]
    %v77 = vld [vmem:[#allocation7 + $0x30] sm:$0xff]
    %v78 = vld [vmem:[#allocation7 + $0x38] sm:$0xff]
    %v79 = vld [vmem:[#allocation7 + $0x40] sm:$0xff]
    %v80 = vld [vmem:[#allocation7 + $0x48] sm:$0xff]
    %v81 = vld [vmem:[#allocation7 + $0x50] sm:$0xff]
    %v82 = vld [vmem:[#allocation7 + $0x58] sm:$0xff]
    %v83 = vld [vmem:[#allocation7 + $0x60] sm:$0xff]
    %v84 = vld [vmem:[#allocation7 + $0x68] sm:$0xff]
    %v85 = vld [vmem:[#allocation7 + $0x70] sm:$0xff]
    %v86 = vld [vmem:[#allocation7 + $0x78] sm:$0xff]
    %v87 = vld [vmem:[%s3] sm:$0x1]
    %v89 = vlaneseq
    %v90 = vshrl.u32 %v89, 7
    %v91 = vsub.s32 0, %v90
    %v92 = vrot.slane %v87, %v91
    %v94 = vld [vmem:[%s4] sm:$0x1]
    %v96 = vlaneseq
    %v97 = vshrl.u32 %v96, 7
    %v98 = vsub.s32 0, %v97
    %v99 = vrot.slane %v94, %v98
    %v101 = vld [vmem:[#allocation8] sm:$0xff]
    %vm102 = vcmask 261120
    %v104 = vsel %vm102, %v65, 0
    %106 = vmatprep.subr.mxu0 0.0
    %107 = vmatpush1.msra.mxu0 %v67
    %108 = vmatprep.subr.mxu0 0.0
    %109 = vmatpush1.msra.mxu0 %v68
    %110 = vmatprep.subr.mxu0 0.0
    %111 = vmatpush1.msra.mxu0 %v69
    %112 = vmatprep.subr.mxu0 0.0
    %113 = vmatpush1.msra.mxu0 %v70
    %114 = vmatprep.subr.mxu0 0.0
    %115 = vmatpush1.msra.mxu0 0.0
    %116 = vmatprep.subr.mxu0 0.0
    %117 = vmatpush1.msra.mxu0 0.0
    %118 = vmatprep.subr.mxu0 0.0
    %119 = vmatpush1.msra.mxu0 0.0
    %120 = vmatprep.subr.mxu0 0.0
    %121 = vmatpush1.msra.mxu0 0.0
    %122 = vmatprep.subr.mxu0 0.0
    %123 = vmatpush1.msra.mxu0 0.0
    %124 = vmatprep.subr.mxu0 0.0
    %125 = vmatpush1.msra.mxu0 0.0
    %126 = vmatprep.subr.mxu0 0.0
    %127 = vmatpush1.msra.mxu0 0.0
    %128 = vmatprep.subr.mxu0 0.0
    %129 = vmatpush1.msra.mxu0 0.0
    %130 = vmatprep.subr.mxu0 0.0
    %131 = vmatpush1.msra.mxu0 0.0
    %132 = vmatprep.subr.mxu0 0.0
    %133 = vmatpush1.msra.mxu0 0.0
    %134 = vmatprep.subr.mxu0 0.0
    %135 = vmatpush1.msra.mxu0 0.0
    %136 = vmatprep.subr.mxu0 0.0
    %137 = vmatpush1.msra.mxu0 0.0
    %138 = vmatprep.subr.mxu0 0.0
    %139 = vmatpush1.msra.mxu0 0.0
    %140 = vmatprep.subr.mxu0 0.0
    %141 = vmatpush1.msra.mxu0 0.0
    %142 = vmatprep.subr.mxu0 0.0
    %143 = vmatpush1.msra.mxu0 0.0
    %144 = vmatprep.subr.mxu0 0.0
    %145 = vmatpush1.msra.mxu0 0.0
    %146 = vmatprep.subr.mxu0 0.0
    %147 = vmatpush1.msra.mxu0 0.0
    %148 = vmatprep.subr.mxu0 0.0
    %149 = vmatpush1.msra.mxu0 0.0
    %150 = vmatprep.subr.mxu0 0.0
    %151 = vmatpush1.msra.mxu0 0.0
    %152 = vmatprep.subr.mxu0 0.0
    %153 = vmatpush1.msra.mxu0 0.0
    %154 = vmatprep.subr.mxu0 0.0
    %155 = vmatpush1.msra.mxu0 0.0
    %156 = vmatprep.subr.mxu0 0.0
    %157 = vmatpush1.msra.mxu0 0.0
    %158 = vmatprep.subr.mxu0 0.0
    %159 = vmatpush1.msra.mxu0 0.0
    %160 = vmatprep.subr.mxu0 0.0
    %161 = vmatpush1.msra.mxu0 0.0
    %162 = vmatprep.subr.mxu0 0.0
    %163 = vmatpush1.msra.mxu0 0.0
    %164 = vmatprep.subr.mxu0 0.0
    %165 = vmatpush1.msra.mxu0 0.0
    %166 = vmatprep.subr.mxu0 0.0
    %167 = vmatpush1.msra.mxu0 0.0
    %168 = vmatprep.subr.mxu0 0.0
    %169 = vmatpush1.msra.mxu0 0.0
    %170 = vmatprep.mubr.f32.mxu0 0.0
    %171 = vmatmul.mubr.f32.gmra.mrb[0].mxu0 %v104
    %v172 = vpop.f32.mrb[0].mxu0
    %v173 = vadd.f32 %v92, %v172
    %v174 = vpop.f32.mrb[0].mxu0
    %175 = vdwg.mxu0
    %176 = vmatprep.subr.mxu0 0.0
    %177 = vmatpush1.msra.mxu0 %v71
    %178 = vmatprep.subr.mxu0 0.0
    %179 = vmatpush1.msra.mxu0 %v72
    %180 = vmatprep.subr.mxu0 0.0
    %181 = vmatpush1.msra.mxu0 %v73
    %182 = vmatprep.subr.mxu0 0.0
    %183 = vmatpush1.msra.mxu0 %v74
    %184 = vmatprep.subr.mxu0 0.0
    %185 = vmatpush1.msra.mxu0 %v75
    %186 = vmatprep.subr.mxu0 0.0
    %187 = vmatpush1.msra.mxu0 %v76
    %188 = vmatprep.subr.mxu0 0.0
    %189 = vmatpush1.msra.mxu0 %v77
    %190 = vmatprep.subr.mxu0 0.0
    %191 = vmatpush1.msra.mxu0 %v78
    %192 = vmatprep.subr.mxu0 0.0
    %193 = vmatpush1.msra.mxu0 %v79
    %194 = vmatprep.subr.mxu0 0.0
    %195 = vmatpush1.msra.mxu0 %v80
    %196 = vmatprep.subr.mxu0 0.0
    %197 = vmatpush1.msra.mxu0 %v81
    %198 = vmatprep.subr.mxu0 0.0
    %199 = vmatpush1.msra.mxu0 %v82
    %200 = vmatprep.subr.mxu0 0.0
    %201 = vmatpush1.msra.mxu0 %v83
    %202 = vmatprep.subr.mxu0 0.0
    %203 = vmatpush1.msra.mxu0 %v84
    %204 = vmatprep.subr.mxu0 0.0
    %205 = vmatpush1.msra.mxu0 %v85
    %206 = vmatprep.subr.mxu0 0.0
    %207 = vmatpush1.msra.mxu0 %v86
    %208 = vmatprep.subr.mxu0 0.0
    %209 = vmatpush1.msra.mxu0 0.0
    %210 = vmatprep.subr.mxu0 0.0
    %211 = vmatpush1.msra.mxu0 0.0
    %212 = vmatprep.subr.mxu0 0.0
    %213 = vmatpush1.msra.mxu0 0.0
    %214 = vmatprep.subr.mxu0 0.0
    %215 = vmatpush1.msra.mxu0 0.0
    %216 = vmatprep.subr.mxu0 0.0
    %217 = vmatpush1.msra.mxu0 0.0
    %218 = vmatprep.subr.mxu0 0.0
    %219 = vmatpush1.msra.mxu0 0.0
    %220 = vmatprep.subr.mxu0 0.0
    %221 = vmatpush1.msra.mxu0 0.0
    %222 = vmatprep.subr.mxu0 0.0
    %223 = vmatpush1.msra.mxu0 0.0
    %224 = vmatprep.subr.mxu0 0.0
    %225 = vmatpush1.msra.mxu0 0.0
    %226 = vmatprep.subr.mxu0 0.0
    %227 = vmatpush1.msra.mxu0 0.0
    %228 = vmatprep.subr.mxu0 0.0
    %229 = vmatpush1.msra.mxu0 0.0
    %230 = vmatprep.subr.mxu0 0.0
    %231 = vmatpush1.msra.mxu0 0.0
    %232 = vmatprep.subr.mxu0 0.0
    %233 = vmatpush1.msra.mxu0 0.0
    %234 = vmatprep.subr.mxu0 0.0
    %235 = vmatpush1.msra.mxu0 0.0
    %236 = vmatprep.subr.mxu0 0.0
    %237 = vmatpush1.msra.mxu0 0.0
    %238 = vmatprep.subr.mxu0 0.0
    %239 = vmatpush1.msra.mxu0 0.0
    %240 = vmatprep.mubr.f32.mxu0 0.0
    %241 = vmatmul.mubr.f32.gmra.mrb[0].mxu0 %v101
    %v242 = vpop.f32.mrb[0].mxu0
    %v243 = vadd.f32 %v99, %v242
    %v244 = vpop.f32.mrb[0].mxu0
    %245 = vdwg.mxu0
    %v246 = vadd.f32 %v173, %v243
    %v247 = vxor.u32 %v246, 2147483648
    %v248 = vmul.f32 %v247, 1.442695
    %v249 = vpow.pop %v248
    %v250 = vadd.f32 %v249, 1.0
    %v251 = vrcp.pop %v250
    %v252 = vmul.f32 1.0, %v251
    %253 = vrot.lane.b32.xlu0 %v252, 64
    %v254 = vpop.permute.xlu0 %253
    %v255 = vmul.f32 %v254, %v243
    %v256 = vadd.f32 %v173, %v255
    %v257 = vtanh.pop %v256
    %258 = vrot.lane.b32.xlu0 %v257, 64
    %v259 = vpop.permute.xlu0 %258
    %260 = vrot.lane.b32.xlu0 %v252, 32
    %v261 = vpop.permute.xlu0 %260
    %v262 = vsub.f32 %v101, %v259
    %v263 = vmul.f32 %v261, %v262
    %v264 = vadd.f32 %v259, %v263
    %265 = vrot.lane.b32.xlu0 %v65, 96
    %v266 = vpop.permute.xlu0 %265
    %v267 = vsel %vm102, %v266, 0
    %269 = vmatprep.subr.mxu0 0.0
    %270 = vmatpush1.msra.mxu0 %v67
    %271 = vmatprep.subr.mxu0 0.0
    %272 = vmatpush1.msra.mxu0 %v68
    %273 = vmatprep.subr.mxu0 0.0
    %274 = vmatpush1.msra.mxu0 %v69
    %275 = vmatprep.subr.mxu0 0.0
    %276 = vmatpush1.msra.mxu0 %v70
    %277 = vmatprep.subr.mxu0 0.0
    %278 = vmatpush1.msra.mxu0 0.0
    %279 = vmatprep.subr.mxu0 0.0
    %280 = vmatpush1.msra.mxu0 0.0
    %281 = vmatprep.subr.mxu0 0.0
    %282 = vmatpush1.msra.mxu0 0.0
    %283 = vmatprep.subr.mxu0 0.0
    %284 = vmatpush1.msra.mxu0 0.0
    %285 = vmatprep.subr.mxu0 0.0
    %286 = vmatpush1.msra.mxu0 0.0
    %287 = vmatprep.subr.mxu0 0.0
    %288 = vmatpush1.msra.mxu0 0.0
    %289 = vmatprep.subr.mxu0 0.0
    %290 = vmatpush1.msra.mxu0 0.0
    %291 = vmatprep.subr.mxu0 0.0
    %292 = vmatpush1.msra.mxu0 0.0
    %293 = vmatprep.subr.mxu0 0.0
    %294 = vmatpush1.msra.mxu0 0.0
    %295 = vmatprep.subr.mxu0 0.0
    %296 = vmatpush1.msra.mxu0 0.0
    %297 = vmatprep.subr.mxu0 0.0
    %298 = vmatpush1.msra.mxu0 0.0
    %299 = vmatprep.subr.mxu0 0.0
    %300 = vmatpush1.msra.mxu0 0.0
    %301 = vmatprep.subr.mxu0 0.0
    %302 = vmatpush1.msra.mxu0 0.0
    %303 = vmatprep.subr.mxu0 0.0
    %304 = vmatpush1.msra.mxu0 0.0
    %305 = vmatprep.subr.mxu0 0.0
    %306 = vmatpush1.msra.mxu0 0.0
    %307 = vmatprep.subr.mxu0 0.0
    %308 = vmatpush1.msra.mxu0 0.0
    %309 = vmatprep.subr.mxu0 0.0
    %310 = vmatpush1.msra.mxu0 0.0
    %311 = vmatprep.subr.mxu0 0.0
    %312 = vmatpush1.msra.mxu0 0.0
    %313 = vmatprep.subr.mxu0 0.0
    %314 = vmatpush1.msra.mxu0 0.0
    %315 = vmatprep.subr.mxu0 0.0
    %316 = vmatpush1.msra.mxu0 0.0
    %317 = vmatprep.subr.mxu0 0.0
    %318 = vmatpush1.msra.mxu0 0.0
    %319 = vmatprep.subr.mxu0 0.0
    %320 = vmatpush1.msra.mxu0 0.0
    %321 = vmatprep.subr.mxu0 0.0
    %322 = vmatpush1.msra.mxu0 0.0
    %323 = vmatprep.subr.mxu0 0.0
    %324 = vmatpush1.msra.mxu0 0.0
    %325 = vmatprep.subr.mxu0 0.0
    %326 = vmatpush1.msra.mxu0 0.0
    %327 = vmatprep.subr.mxu0 0.0
    %328 = vmatpush1.msra.mxu0 0.0
    %329 = vmatprep.subr.mxu0 0.0
    %330 = vmatpush1.msra.mxu0 0.0
    %331 = vmatprep.subr.mxu0 0.0
    %332 = vmatpush1.msra.mxu0 0.0
    %333 = vmatprep.mubr.f32.mxu0 0.0
    %334 = vmatmul.mubr.f32.gmra.mrb[0].mxu0 %v267
    %v335 = vpop.f32.mrb[0].mxu0
    %v336 = vadd.f32 %v92, %v335
    %v337 = vpop.f32.mrb[0].mxu0
    %338 = vdwg.mxu0
    %339 = vmatprep.subr.mxu0 0.0
    %340 = vmatpush1.msra.mxu0 %v71
    %341 = vmatprep.subr.mxu0 0.0
    %342 = vmatpush1.msra.mxu0 %v72
    %343 = vmatprep.subr.mxu0 0.0
    %344 = vmatpush1.msra.mxu0 %v73
    %345 = vmatprep.subr.mxu0 0.0
    %346 = vmatpush1.msra.mxu0 %v74
    %347 = vmatprep.subr.mxu0 0.0
    %348 = vmatpush1.msra.mxu0 %v75
    %349 = vmatprep.subr.mxu0 0.0
    %350 = vmatpush1.msra.mxu0 %v76
    %351 = vmatprep.subr.mxu0 0.0
    %352 = vmatpush1.msra.mxu0 %v77
    %353 = vmatprep.subr.mxu0 0.0
    %354 = vmatpush1.msra.mxu0 %v78
    %355 = vmatprep.subr.mxu0 0.0
    %356 = vmatpush1.msra.mxu0 %v79
    %357 = vmatprep.subr.mxu0 0.0
    %358 = vmatpush1.msra.mxu0 %v80
    %359 = vmatprep.subr.mxu0 0.0
    %360 = vmatpush1.msra.mxu0 %v81
    %361 = vmatprep.subr.mxu0 0.0
    %362 = vmatpush1.msra.mxu0 %v82
    %363 = vmatprep.subr.mxu0 0.0
    %364 = vmatpush1.msra.mxu0 %v83
    %365 = vmatprep.subr.mxu0 0.0
    %366 = vmatpush1.msra.mxu0 %v84
    %367 = vmatprep.subr.mxu0 0.0
    %368 = vmatpush1.msra.mxu0 %v85
    %369 = vmatprep.subr.mxu0 0.0
    %370 = vmatpush1.msra.mxu0 %v86
    %371 = vmatprep.subr.mxu0 0.0
    %372 = vmatpush1.msra.mxu0 0.0
    %373 = vmatprep.subr.mxu0 0.0
    %374 = vmatpush1.msra.mxu0 0.0
    %375 = vmatprep.subr.mxu0 0.0
    %376 = vmatpush1.msra.mxu0 0.0
    %377 = vmatprep.subr.mxu0 0.0
    %378 = vmatpush1.msra.mxu0 0.0
    %379 = vmatprep.subr.mxu0 0.0
    %380 = vmatpush1.msra.mxu0 0.0
    %381 = vmatprep.subr.mxu0 0.0
    %382 = vmatpush1.msra.mxu0 0.0
    %383 = vmatprep.subr.mxu0 0.0
    %384 = vmatpush1.msra.mxu0 0.0
    %385 = vmatprep.subr.mxu0 0.0
    %386 = vmatpush1.msra.mxu0 0.0
    %387 = vmatprep.subr.mxu0 0.0
    %388 = vmatpush1.msra.mxu0 0.0
    %389 = vmatprep.subr.mxu0 0.0
    %390 = vmatpush1.msra.mxu0 0.0
    %391 = vmatprep.subr.mxu0 0.0
    %392 = vmatpush1.msra.mxu0 0.0
    %393 = vmatprep.subr.mxu0 0.0
    %394 = vmatpush1.msra.mxu0 0.0
    %395 = vmatprep.subr.mxu0 0.0
    %396 = vmatpush1.msra.mxu0 0.0
    %397 = vmatprep.subr.mxu0 0.0
    %398 = vmatpush1.msra.mxu0 0.0
    %399 = vmatprep.subr.mxu0 0.0
    %400 = vmatpush1.msra.mxu0 0.0
    %401 = vmatprep.subr.mxu0 0.0
    %402 = vmatpush1.msra.mxu0 0.0
    %403 = vmatprep.mubr.f32.mxu0 0.0
    %404 = vmatmul.mubr.f32.gmra.mrb[0].mxu0 %v264
    %v405 = vpop.f32.mrb[0].mxu0
    %v406 = vadd.f32 %v99, %v405
    %v407 = vpop.f32.mrb[0].mxu0
    %408 = vdwg.mxu0
    %v409 = vadd.f32 %v336, %v406
    %v410 = vxor.u32 %v409, 2147483648
    %v411 = vmul.f32 %v410, 1.442695
    %v412 = vpow.pop %v411
    %v413 = vadd.f32 %v412, 1.0
    %v414 = vrcp.pop %v413
    %v415 = vmul.f32 1.0, %v414
    %416 = vrot.lane.b32.xlu0 %v415, 64
    %v417 = vpop.permute.xlu0 %416
    %v418 = vmul.f32 %v417, %v406
    %v419 = vadd.f32 %v336, %v418
    %v420 = vtanh.pop %v419
    %421 = vrot.lane.b32.xlu0 %v420, 64
    %v422 = vpop.permute.xlu0 %421
    %423 = vrot.lane.b32.xlu0 %v415, 32
    %v424 = vpop.permute.xlu0 %423
    %v425 = vsub.f32 %v264, %v422
    %v426 = vmul.f32 %v424, %v425
    %v427 = vadd.f32 %v422, %v426
    %428 = vrot.lane.b32.xlu0 %v65, 64
    %v429 = vpop.permute.xlu0 %428
    %v430 = vsel %vm102, %v429, 0
    %432 = vmatprep.subr.mxu0 0.0
    %433 = vmatpush1.msra.mxu0 %v67
    %434 = vmatprep.subr.mxu0 0.0
    %435 = vmatpush1.msra.mxu0 %v68
    %436 = vmatprep.subr.mxu0 0.0
    %437 = vmatpush1.msra.mxu0 %v69
    %438 = vmatprep.subr.mxu0 0.0
    %439 = vmatpush1.msra.mxu0 %v70
    %440 = vmatprep.subr.mxu0 0.0
    %441 = vmatpush1.msra.mxu0 0.0
    %442 = vmatprep.subr.mxu0 0.0
    %443 = vmatpush1.msra.mxu0 0.0
    %444 = vmatprep.subr.mxu0 0.0
    %445 = vmatpush1.msra.mxu0 0.0
    %446 = vmatprep.subr.mxu0 0.0
    %447 = vmatpush1.msra.mxu0 0.0
    %448 = vmatprep.subr.mxu0 0.0
    %449 = vmatpush1.msra.mxu0 0.0
    %450 = vmatprep.subr.mxu0 0.0
    %451 = vmatpush1.msra.mxu0 0.0
    %452 = vmatprep.subr.mxu0 0.0
    %453 = vmatpush1.msra.mxu0 0.0
    %454 = vmatprep.subr.mxu0 0.0
    %455 = vmatpush1.msra.mxu0 0.0
    %456 = vmatprep.subr.mxu0 0.0
    %457 = vmatpush1.msra.mxu0 0.0
    %458 = vmatprep.subr.mxu0 0.0
    %459 = vmatpush1.msra.mxu0 0.0
    %460 = vmatprep.subr.mxu0 0.0
    %461 = vmatpush1.msra.mxu0 0.0
    %462 = vmatprep.subr.mxu0 0.0
    %463 = vmatpush1.msra.mxu0 0.0
    %464 = vmatprep.subr.mxu0 0.0
    %465 = vmatpush1.msra.mxu0 0.0
    %466 = vmatprep.subr.mxu0 0.0
    %467 = vmatpush1.msra.mxu0 0.0
    %468 = vmatprep.subr.mxu0 0.0
    %469 = vmatpush1.msra.mxu0 0.0
    %470 = vmatprep.subr.mxu0 0.0
    %471 = vmatpush1.msra.mxu0 0.0
    %472 = vmatprep.subr.mxu0 0.0
    %473 = vmatpush1.msra.mxu0 0.0
    %474 = vmatprep.subr.mxu0 0.0
    %475 = vmatpush1.msra.mxu0 0.0
    %476 = vmatprep.subr.mxu0 0.0
    %477 = vmatpush1.msra.mxu0 0.0
    %478 = vmatprep.subr.mxu0 0.0
    %479 = vmatpush1.msra.mxu0 0.0
    %480 = vmatprep.subr.mxu0 0.0
    %481 = vmatpush1.msra.mxu0 0.0
    %482 = vmatprep.subr.mxu0 0.0
    %483 = vmatpush1.msra.mxu0 0.0
    %484 = vmatprep.subr.mxu0 0.0
    %485 = vmatpush1.msra.mxu0 0.0
    %486 = vmatprep.subr.mxu0 0.0
    %487 = vmatpush1.msra.mxu0 0.0
    %488 = vmatprep.subr.mxu0 0.0
    %489 = vmatpush1.msra.mxu0 0.0
    %490 = vmatprep.subr.mxu0 0.0
    %491 = vmatpush1.msra.mxu0 0.0
    %492 = vmatprep.subr.mxu0 0.0
    %493 = vmatpush1.msra.mxu0 0.0
    %494 = vmatprep.subr.mxu0 0.0
    %495 = vmatpush1.msra.mxu0 0.0
    %496 = vmatprep.mubr.f32.mxu0 0.0
    %497 = vmatmul.mubr.f32.gmra.mrb[0].mxu0 %v430
    %v498 = vpop.f32.mrb[0].mxu0
    %v499 = vadd.f32 %v92, %v498
    %v500 = vpop.f32.mrb[0].mxu0
    %501 = vdwg.mxu0
    %502 = vmatprep.subr.mxu0 0.0
    %503 = vmatpush1.msra.mxu0 %v71
    %504 = vmatprep.subr.mxu0 0.0
    %505 = vmatpush1.msra.mxu0 %v72
    %506 = vmatprep.subr.mxu0 0.0
    %507 = vmatpush1.msra.mxu0 %v73
    %508 = vmatprep.subr.mxu0 0.0
    %509 = vmatpush1.msra.mxu0 %v74
    %510 = vmatprep.subr.mxu0 0.0
    %511 = vmatpush1.msra.mxu0 %v75
    %512 = vmatprep.subr.mxu0 0.0
    %513 = vmatpush1.msra.mxu0 %v76
    %514 = vmatprep.subr.mxu0 0.0
    %515 = vmatpush1.msra.mxu0 %v77
    %516 = vmatprep.subr.mxu0 0.0
    %517 = vmatpush1.msra.mxu0 %v78
    %518 = vmatprep.subr.mxu0 0.0
    %519 = vmatpush1.msra.mxu0 %v79
    %520 = vmatprep.subr.mxu0 0.0
    %521 = vmatpush1.msra.mxu0 %v80
    %522 = vmatprep.subr.mxu0 0.0
    %523 = vmatpush1.msra.mxu0 %v81
    %524 = vmatprep.subr.mxu0 0.0
    %525 = vmatpush1.msra.mxu0 %v82
    %526 = vmatprep.subr.mxu0 0.0
    %527 = vmatpush1.msra.mxu0 %v83
    %528 = vmatprep.subr.mxu0 0.0
    %529 = vmatpush1.msra.mxu0 %v84
    %530 = vmatprep.subr.mxu0 0.0
    %531 = vmatpush1.msra.mxu0 %v85
    %532 = vmatprep.subr.mxu0 0.0
    %533 = vmatpush1.msra.mxu0 %v86
    %534 = vmatprep.subr.mxu0 0.0
    %535 = vmatpush1.msra.mxu0 0.0
    %536 = vmatprep.subr.mxu0 0.0
    %537 = vmatpush1.msra.mxu0 0.0
    %538 = vmatprep.subr.mxu0 0.0
    %539 = vmatpush1.msra.mxu0 0.0
    %540 = vmatprep.subr.mxu0 0.0
    %541 = vmatpush1.msra.mxu0 0.0
    %542 = vmatprep.subr.mxu0 0.0
    %543 = vmatpush1.msra.mxu0 0.0
    %544 = vmatprep.subr.mxu0 0.0
    %545 = vmatpush1.msra.mxu0 0.0
    %546 = vmatprep.subr.mxu0 0.0
    %547 = vmatpush1.msra.mxu0 0.0
    %548 = vmatprep.subr.mxu0 0.0
    %549 = vmatpush1.msra.mxu0 0.0
    %550 = vmatprep.subr.mxu0 0.0
    %551 = vmatpush1.msra.mxu0 0.0
    %552 = vmatprep.subr.mxu0 0.0
    %553 = vmatpush1.msra.mxu0 0.0
    %554 = vmatprep.subr.mxu0 0.0
    %555 = vmatpush1.msra.mxu0 0.0
    %556 = vmatprep.subr.mxu0 0.0
    %557 = vmatpush1.msra.mxu0 0.0
    %558 = vmatprep.subr.mxu0 0.0
    %559 = vmatpush1.msra.mxu0 0.0
    %560 = vmatprep.subr.mxu0 0.0
    %561 = vmatpush1.msra.mxu0 0.0
    %562 = vmatprep.subr.mxu0 0.0
    %563 = vmatpush1.msra.mxu0 0.0
    %564 = vmatprep.subr.mxu0 0.0
    %565 = vmatpush1.msra.mxu0 0.0
    %566 = vmatprep.mubr.f32.mxu0 0.0
    %567 = vmatmul.mubr.f32.gmra.mrb[0].mxu0 %v427
    %v568 = vpop.f32.mrb[0].mxu0
    %v569 = vadd.f32 %v99, %v568
    %v570 = vpop.f32.mrb[0].mxu0
    %571 = vdwg.mxu0
    %v572 = vadd.f32 %v499, %v569
    %v573 = vxor.u32 %v572, 2147483648
    %v574 = vmul.f32 %v573, 1.442695
    %v575 = vpow.pop %v574
    %v576 = vadd.f32 %v575, 1.0
    %v577 = vrcp.pop %v576
    %v578 = vmul.f32 1.0, %v577
    %579 = vrot.lane.b32.xlu0 %v578, 64
    %v580 = vpop.permute.xlu0 %579
    %v581 = vmul.f32 %v580, %v569
    %v582 = vadd.f32 %v499, %v581
    %v583 = vtanh.pop %v582
    %584 = vrot.lane.b32.xlu0 %v583, 64
    %v585 = vpop.permute.xlu0 %584
    %586 = vrot.lane.b32.xlu0 %v578, 32
    %v587 = vpop.permute.xlu0 %586
    %v588 = vsub.f32 %v427, %v585
    %v589 = vmul.f32 %v587, %v588
    %v590 = vadd.f32 %v585, %v589
    %591 = vrot.lane.b32.xlu0 %v65, 32
    %v592 = vpop.permute.xlu0 %591
    %v593 = vsel %vm102, %v592, 0
    %595 = vmatprep.subr.mxu0 0.0
    %596 = vmatpush1.msra.mxu0 %v67
    %597 = vmatprep.subr.mxu0 0.0
    %598 = vmatpush1.msra.mxu0 %v68
    %599 = vmatprep.subr.mxu0 0.0
    %600 = vmatpush1.msra.mxu0 %v69
    %601 = vmatprep.subr.mxu0 0.0
    %602 = vmatpush1.msra.mxu0 %v70
    %603 = vmatprep.subr.mxu0 0.0
    %604 = vmatpush1.msra.mxu0 0.0
    %605 = vmatprep.subr.mxu0 0.0
    %606 = vmatpush1.msra.mxu0 0.0
    %607 = vmatprep.subr.mxu0 0.0
    %608 = vmatpush1.msra.mxu0 0.0
    %609 = vmatprep.subr.mxu0 0.0
    %610 = vmatpush1.msra.mxu0 0.0
    %611 = vmatprep.subr.mxu0 0.0
    %612 = vmatpush1.msra.mxu0 0.0
    %613 = vmatprep.subr.mxu0 0.0
    %614 = vmatpush1.msra.mxu0 0.0
    %615 = vmatprep.subr.mxu0 0.0
    %616 = vmatpush1.msra.mxu0 0.0
    %617 = vmatprep.subr.mxu0 0.0
    %618 = vmatpush1.msra.mxu0 0.0
    %619 = vmatprep.subr.mxu0 0.0
    %620 = vmatpush1.msra.mxu0 0.0
    %621 = vmatprep.subr.mxu0 0.0
    %622 = vmatpush1.msra.mxu0 0.0
    %623 = vmatprep.subr.mxu0 0.0
    %624 = vmatpush1.msra.mxu0 0.0
    %625 = vmatprep.subr.mxu0 0.0
    %626 = vmatpush1.msra.mxu0 0.0
    %627 = vmatprep.subr.mxu0 0.0
    %628 = vmatpush1.msra.mxu0 0.0
    %629 = vmatprep.subr.mxu0 0.0
    %630 = vmatpush1.msra.mxu0 0.0
    %631 = vmatprep.subr.mxu0 0.0
    %632 = vmatpush1.msra.mxu0 0.0
    %633 = vmatprep.subr.mxu0 0.0
    %634 = vmatpush1.msra.mxu0 0.0
    %635 = vmatprep.subr.mxu0 0.0
    %636 = vmatpush1.msra.mxu0 0.0
    %637 = vmatprep.subr.mxu0 0.0
    %638 = vmatpush1.msra.mxu0 0.0
    %639 = vmatprep.subr.mxu0 0.0
    %640 = vmatpush1.msra.mxu0 0.0
    %641 = vmatprep.subr.mxu0 0.0
    %642 = vmatpush1.msra.mxu0 0.0
    %643 = vmatprep.subr.mxu0 0.0
    %644 = vmatpush1.msra.mxu0 0.0
    %645 = vmatprep.subr.mxu0 0.0
    %646 = vmatpush1.msra.mxu0 0.0
    %647 = vmatprep.subr.mxu0 0.0
    %648 = vmatpush1.msra.mxu0 0.0
    %649 = vmatprep.subr.mxu0 0.0
    %650 = vmatpush1.msra.mxu0 0.0
    %651 = vmatprep.subr.mxu0 0.0
    %652 = vmatpush1.msra.mxu0 0.0
    %653 = vmatprep.subr.mxu0 0.0
    %654 = vmatpush1.msra.mxu0 0.0
    %655 = vmatprep.subr.mxu0 0.0
    %656 = vmatpush1.msra.mxu0 0.0
    %657 = vmatprep.subr.mxu0 0.0
    %658 = vmatpush1.msra.mxu0 0.0
    %659 = vmatprep.mubr.f32.mxu0 0.0
    %660 = vmatmul.mubr.f32.gmra.mrb[0].mxu0 %v593
    %v661 = vpop.f32.mrb[0].mxu0
    %v662 = vadd.f32 %v92, %v661
    %v663 = vpop.f32.mrb[0].mxu0
    %664 = vdwg.mxu0
    %665 = vmatprep.subr.mxu0 0.0
    %666 = vmatpush1.msra.mxu0 %v71
    %667 = vmatprep.subr.mxu0 0.0
    %668 = vmatpush1.msra.mxu0 %v72
    %669 = vmatprep.subr.mxu0 0.0
    %670 = vmatpush1.msra.mxu0 %v73
    %671 = vmatprep.subr.mxu0 0.0
    %672 = vmatpush1.msra.mxu0 %v74
    %673 = vmatprep.subr.mxu0 0.0
    %674 = vmatpush1.msra.mxu0 %v75
    %675 = vmatprep.subr.mxu0 0.0
    %676 = vmatpush1.msra.mxu0 %v76
    %677 = vmatprep.subr.mxu0 0.0
    %678 = vmatpush1.msra.mxu0 %v77
    %679 = vmatprep.subr.mxu0 0.0
    %680 = vmatpush1.msra.mxu0 %v78
    %681 = vmatprep.subr.mxu0 0.0
    %682 = vmatpush1.msra.mxu0 %v79
    %683 = vmatprep.subr.mxu0 0.0
    %684 = vmatpush1.msra.mxu0 %v80
    %685 = vmatprep.subr.mxu0 0.0
    %686 = vmatpush1.msra.mxu0 %v81
    %687 = vmatprep.subr.mxu0 0.0
    %688 = vmatpush1.msra.mxu0 %v82
    %689 = vmatprep.subr.mxu0 0.0
    %690 = vmatpush1.msra.mxu0 %v83
    %691 = vmatprep.subr.mxu0 0.0
    %692 = vmatpush1.msra.mxu0 %v84
    %693 = vmatprep.subr.mxu0 0.0
    %694 = vmatpush1.msra.mxu0 %v85
    %695 = vmatprep.subr.mxu0 0.0
    %696 = vmatpush1.msra.mxu0 %v86
    %697 = vmatprep.subr.mxu0 0.0
    %698 = vmatpush1.msra.mxu0 0.0
    %699 = vmatprep.subr.mxu0 0.0
    %700 = vmatpush1.msra.mxu0 0.0
    %701 = vmatprep.subr.mxu0 0.0
    %702 = vmatpush1.msra.mxu0 0.0
    %703 = vmatprep.subr.mxu0 0.0
    %704 = vmatpush1.msra.mxu0 0.0
    %705 = vmatprep.subr.mxu0 0.0
    %706 = vmatpush1.msra.mxu0 0.0
    %707 = vmatprep.subr.mxu0 0.0
    %708 = vmatpush1.msra.mxu0 0.0
    %709 = vmatprep.subr.mxu0 0.0
    %710 = vmatpush1.msra.mxu0 0.0
    %711 = vmatprep.subr.mxu0 0.0
    %712 = vmatpush1.msra.mxu0 0.0
    %713 = vmatprep.subr.mxu0 0.0
    %714 = vmatpush1.msra.mxu0 0.0
    %715 = vmatprep.subr.mxu0 0.0
    %716 = vmatpush1.msra.mxu0 0.0
    %717 = vmatprep.subr.mxu0 0.0
    %718 = vmatpush1.msra.mxu0 0.0
    %719 = vmatprep.subr.mxu0 0.0
    %720 = vmatpush1.msra.mxu0 0.0
    %721 = vmatprep.subr.mxu0 0.0
    %722 = vmatpush1.msra.mxu0 0.0
    %723 = vmatprep.subr.mxu0 0.0
    %724 = vmatpush1.msra.mxu0 0.0
    %725 = vmatprep.subr.mxu0 0.0
    %726 = vmatpush1.msra.mxu0 0.0
    %727 = vmatprep.subr.mxu0 0.0
    %728 = vmatpush1.msra.mxu0 0.0
    %729 = vmatprep.mubr.f32.mxu0 0.0
    %730 = vmatmul.mubr.f32.gmra.mrb[0].mxu0 %v590
    %v731 = vpop.f32.mrb[0].mxu0
    %v732 = vadd.f32 %v99, %v731
    %v733 = vpop.f32.mrb[0].mxu0
    %734 = vdwg.mxu0
    %v735 = vadd.f32 %v662, %v732
    %v736 = vxor.u32 %v735, 2147483648
    %v737 = vmul.f32 %v736, 1.442695
    %v738 = vpow.pop %v737
    %v739 = vadd.f32 %v738, 1.0
    %v740 = vrcp.pop %v739
    %v741 = vmul.f32 1.0, %v740
    %742 = vrot.lane.b32.xlu0 %v741, 64
    %v743 = vpop.permute.xlu0 %742
    %v744 = vmul.f32 %v743, %v732
    %v745 = vadd.f32 %v662, %v744
    %v746 = vtanh.pop %v745
    %747 = vrot.lane.b32.xlu0 %v746, 64
    %v748 = vpop.permute.xlu0 %747
    %749 = vrot.lane.b32.xlu0 %v741, 32
    %v750 = vpop.permute.xlu0 %749
    %v751 = vsub.f32 %v590, %v748
    %v752 = vmul.f32 %v750, %v751
    %v753 = vadd.f32 %v748, %v752
    %v755 = vsel %vm102, %v66, 0
    %757 = vmatprep.subr.mxu0 0.0
    %758 = vmatpush1.msra.mxu0 %v67
    %759 = vmatprep.subr.mxu0 0.0
    %760 = vmatpush1.msra.mxu0 %v68
    %761 = vmatprep.subr.mxu0 0.0
    %762 = vmatpush1.msra.mxu0 %v69
    %763 = vmatprep.subr.mxu0 0.0
    %764 = vmatpush1.msra.mxu0 %v70
    %765 = vmatprep.subr.mxu0 0.0
    %766 = vmatpush1.msra.mxu0 0.0
    %767 = vmatprep.subr.mxu0 0.0
    %768 = vmatpush1.msra.mxu0 0.0
    %769 = vmatprep.subr.mxu0 0.0
    %770 = vmatpush1.msra.mxu0 0.0
    %771 = vmatprep.subr.mxu0 0.0
    %772 = vmatpush1.msra.mxu0 0.0
    %773 = vmatprep.subr.mxu0 0.0
    %774 = vmatpush1.msra.mxu0 0.0
    %775 = vmatprep.subr.mxu0 0.0
    %776 = vmatpush1.msra.mxu0 0.0
    %777 = vmatprep.subr.mxu0 0.0
    %778 = vmatpush1.msra.mxu0 0.0
    %779 = vmatprep.subr.mxu0 0.0
    %780 = vmatpush1.msra.mxu0 0.0
    %781 = vmatprep.subr.mxu0 0.0
    %782 = vmatpush1.msra.mxu0 0.0
    %783 = vmatprep.subr.mxu0 0.0
    %784 = vmatpush1.msra.mxu0 0.0
    %785 = vmatprep.subr.mxu0 0.0
    %786 = vmatpush1.msra.mxu0 0.0
    %787 = vmatprep.subr.mxu0 0.0
    %788 = vmatpush1.msra.mxu0 0.0
    %789 = vmatprep.subr.mxu0 0.0
    %790 = vmatpush1.msra.mxu0 0.0
    %791 = vmatprep.subr.mxu0 0.0
    %792 = vmatpush1.msra.mxu0 0.0
    %793 = vmatprep.subr.mxu0 0.0
    %794 = vmatpush1.msra.mxu0 0.0
    %795 = vmatprep.subr.mxu0 0.0
    %796 = vmatpush1.msra.mxu0 0.0
    %797 = vmatprep.subr.mxu0 0.0
    %798 = vmatpush1.msra.mxu0 0.0
    %799 = vmatprep.subr.mxu0 0.0
    %800 = vmatpush1.msra.mxu0 0.0
    %801 = vmatprep.subr.mxu0 0.0
    %802 = vmatpush1.msra.mxu0 0.0
    %803 = vmatprep.subr.mxu0 0.0
    %804 = vmatpush1.msra.mxu0 0.0
    %805 = vmatprep.subr.mxu0 0.0
    %806 = vmatpush1.msra.mxu0 0.0
    %807 = vmatprep.subr.mxu0 0.0
    %808 = vmatpush1.msra.mxu0 0.0
    %809 = vmatprep.subr.mxu0 0.0
    %810 = vmatpush1.msra.mxu0 0.0
    %811 = vmatprep.subr.mxu0 0.0
    %812 = vmatpush1.msra.mxu0 0.0
    %813 = vmatprep.subr.mxu0 0.0
    %814 = vmatpush1.msra.mxu0 0.0
    %815 = vmatprep.subr.mxu0 0.0
    %816 = vmatpush1.msra.mxu0 0.0
    %817 = vmatprep.subr.mxu0 0.0
    %818 = vmatpush1.msra.mxu0 0.0
    %819 = vmatprep.subr.mxu0 0.0
    %820 = vmatpush1.msra.mxu0 0.0
    %821 = vmatprep.mubr.f32.mxu0 0.0
    %822 = vmatmul.mubr.f32.gmra.mrb[0].mxu0 %v755
    %v823 = vpop.f32.mrb[0].mxu0
    %v824 = vadd.f32 %v92, %v823
    %v825 = vpop.f32.mrb[0].mxu0
    %826 = vdwg.mxu0
    %827 = vmatprep.subr.mxu0 0.0
    %828 = vmatpush1.msra.mxu0 %v71
    %829 = vmatprep.subr.mxu0 0.0
    %830 = vmatpush1.msra.mxu0 %v72
    %831 = vmatprep.subr.mxu0 0.0
    %832 = vmatpush1.msra.mxu0 %v73
    %833 = vmatprep.subr.mxu0 0.0
    %834 = vmatpush1.msra.mxu0 %v74
    %835 = vmatprep.subr.mxu0 0.0
    %836 = vmatpush1.msra.mxu0 %v75
    %837 = vmatprep.subr.mxu0 0.0
    %838 = vmatpush1.msra.mxu0 %v76
    %839 = vmatprep.subr.mxu0 0.0
    %840 = vmatpush1.msra.mxu0 %v77
    %841 = vmatprep.subr.mxu0 0.0
    %842 = vmatpush1.msra.mxu0 %v78
    %843 = vmatprep.subr.mxu0 0.0
    %844 = vmatpush1.msra.mxu0 %v79
    %845 = vmatprep.subr.mxu0 0.0
    %846 = vmatpush1.msra.mxu0 %v80
    %847 = vmatprep.subr.mxu0 0.0
    %848 = vmatpush1.msra.mxu0 %v81
    %849 = vmatprep.subr.mxu0 0.0
    %850 = vmatpush1.msra.mxu0 %v82
    %851 = vmatprep.subr.mxu0 0.0
    %852 = vmatpush1.msra.mxu0 %v83
    %853 = vmatprep.subr.mxu0 0.0
    %854 = vmatpush1.msra.mxu0 %v84
    %855 = vmatprep.subr.mxu0 0.0
    %856 = vmatpush1.msra.mxu0 %v85
    %857 = vmatprep.subr.mxu0 0.0
    %858 = vmatpush1.msra.mxu0 %v86
    %859 = vmatprep.subr.mxu0 0.0
    %860 = vmatpush1.msra.mxu0 0.0
    %861 = vmatprep.subr.mxu0 0.0
    %862 = vmatpush1.msra.mxu0 0.0
    %863 = vmatprep.subr.mxu0 0.0
    %864 = vmatpush1.msra.mxu0 0.0
    %865 = vmatprep.subr.mxu0 0.0
    %866 = vmatpush1.msra.mxu0 0.0
    %867 = vmatprep.subr.mxu0 0.0
    %868 = vmatpush1.msra.mxu0 0.0
    %869 = vmatprep.subr.mxu0 0.0
    %870 = vmatpush1.msra.mxu0 0.0
    %871 = vmatprep.subr.mxu0 0.0
    %872 = vmatpush1.msra.mxu0 0.0
    %873 = vmatprep.subr.mxu0 0.0
    %874 = vmatpush1.msra.mxu0 0.0
    %875 = vmatprep.subr.mxu0 0.0
    %876 = vmatpush1.msra.mxu0 0.0
    %877 = vmatprep.subr.mxu0 0.0
    %878 = vmatpush1.msra.mxu0 0.0
    %879 = vmatprep.subr.mxu0 0.0
    %880 = vmatpush1.msra.mxu0 0.0
    %881 = vmatprep.subr.mxu0 0.0
    %882 = vmatpush1.msra.mxu0 0.0
    %883 = vmatprep.subr.mxu0 0.0
    %884 = vmatpush1.msra.mxu0 0.0
    %885 = vmatprep.subr.mxu0 0.0
    %886 = vmatpush1.msra.mxu0 0.0
    %887 = vmatprep.subr.mxu0 0.0
    %888 = vmatpush1.msra.mxu0 0.0
    %889 = vmatprep.subr.mxu0 0.0
    %890 = vmatpush1.msra.mxu0 0.0
    %891 = vmatprep.mubr.f32.mxu0 0.0
    %892 = vmatmul.mubr.f32.gmra.mrb[0].mxu0 %v753
    %v893 = vpop.f32.mrb[0].mxu0
    %v894 = vadd.f32 %v99, %v893
    %v895 = vpop.f32.mrb[0].mxu0
    %896 = vdwg.mxu0
    %v897 = vadd.f32 %v824, %v894
    %v898 = vxor.u32 %v897, 2147483648
    %v899 = vmul.f32 %v898, 1.442695
    %v900 = vpow.pop %v899
    %v901 = vadd.f32 %v900, 1.0
    %v902 = vrcp.pop %v901
    %v903 = vmul.f32 1.0, %v902
    %904 = vrot.lane.b32.xlu0 %v903, 64
    %v905 = vpop.permute.xlu0 %904
    %v906 = vmul.f32 %v905, %v894
    %v907 = vadd.f32 %v824, %v906
    %v908 = vtanh.pop %v907
    %909 = vrot.lane.b32.xlu0 %v908, 64
    %v910 = vpop.permute.xlu0 %909
    %911 = vrot.lane.b32.xlu0 %v903, 32
    %v912 = vpop.permute.xlu0 %911
    %v913 = vsub.f32 %v753, %v910
    %v914 = vmul.f32 %v912, %v913
    %v915 = vadd.f32 %v910, %v914
    %916 = vrot.lane.b32.xlu0 %v66, 96
    %v917 = vpop.permute.xlu0 %916
    %v918 = vsel %vm102, %v917, 0
    %920 = vmatprep.subr.mxu0 0.0
    %921 = vmatpush1.msra.mxu0 %v67
    %922 = vmatprep.subr.mxu0 0.0
    %923 = vmatpush1.msra.mxu0 %v68
    %924 = vmatprep.subr.mxu0 0.0
    %925 = vmatpush1.msra.mxu0 %v69
    %926 = vmatprep.subr.mxu0 0.0
    %927 = vmatpush1.msra.mxu0 %v70
    %928 = vmatprep.subr.mxu0 0.0
    %929 = vmatpush1.msra.mxu0 0.0
    %930 = vmatprep.subr.mxu0 0.0
    %931 = vmatpush1.msra.mxu0 0.0
    %932 = vmatprep.subr.mxu0 0.0
    %933 = vmatpush1.msra.mxu0 0.0
    %934 = vmatprep.subr.mxu0 0.0
    %935 = vmatpush1.msra.mxu0 0.0
    %936 = vmatprep.subr.mxu0 0.0
    %937 = vmatpush1.msra.mxu0 0.0
    %938 = vmatprep.subr.mxu0 0.0
    %939 = vmatpush1.msra.mxu0 0.0
    %940 = vmatprep.subr.mxu0 0.0
    %941 = vmatpush1.msra.mxu0 0.0
    %942 = vmatprep.subr.mxu0 0.0
    %943 = vmatpush1.msra.mxu0 0.0
    %944 = vmatprep.subr.mxu0 0.0
    %945 = vmatpush1.msra.mxu0 0.0
    %946 = vmatprep.subr.mxu0 0.0
    %947 = vmatpush1.msra.mxu0 0.0
    %948 = vmatprep.subr.mxu0 0.0
    %949 = vmatpush1.msra.mxu0 0.0
    %950 = vmatprep.subr.mxu0 0.0
    %951 = vmatpush1.msra.mxu0 0.0
    %952 = vmatprep.subr.mxu0 0.0
    %953 = vmatpush1.msra.mxu0 0.0
    %954 = vmatprep.subr.mxu0 0.0
    %955 = vmatpush1.msra.mxu0 0.0
    %956 = vmatprep.subr.mxu0 0.0
    %957 = vmatpush1.msra.mxu0 0.0
    %958 = vmatprep.subr.mxu0 0.0
    %959 = vmatpush1.msra.mxu0 0.0
    %960 = vmatprep.subr.mxu0 0.0
    %961 = vmatpush1.msra.mxu0 0.0
    %962 = vmatprep.subr.mxu0 0.0
    %963 = vmatpush1.msra.mxu0 0.0
    %964 = vmatprep.subr.mxu0 0.0
    %965 = vmatpush1.msra.mxu0 0.0
    %966 = vmatprep.subr.mxu0 0.0
    %967 = vmatpush1.msra.mxu0 0.0
    %968 = vmatprep.subr.mxu0 0.0
    %969 = vmatpush1.msra.mxu0 0.0
    %970 = vmatprep.subr.mxu0 0.0
    %971 = vmatpush1.msra.mxu0 0.0
    %972 = vmatprep.subr.mxu0 0.0
    %973 = vmatpush1.msra.mxu0 0.0
    %974 = vmatprep.subr.mxu0 0.0
    %975 = vmatpush1.msra.mxu0 0.0
    %976 = vmatprep.subr.mxu0 0.0
    %977 = vmatpush1.msra.mxu0 0.0
    %978 = vmatprep.subr.mxu0 0.0
    %979 = vmatpush1.msra.mxu0 0.0
    %980 = vmatprep.subr.mxu0 0.0
    %981 = vmatpush1.msra.mxu0 0.0
    %982 = vmatprep.subr.mxu0 0.0
    %983 = vmatpush1.msra.mxu0 0.0
    %984 = vmatprep.mubr.f32.mxu0 0.0
    %985 = vmatmul.mubr.f32.gmra.mrb[0].mxu0 %v918
    %v986 = vpop.f32.mrb[0].mxu0
    %v987 = vadd.f32 %v92, %v986
    %v988 = vpop.f32.mrb[0].mxu0
    %989 = vdwg.mxu0
    %990 = vmatprep.subr.mxu0 0.0
    %991 = vmatpush1.msra.mxu0 %v71
    %992 = vmatprep.subr.mxu0 0.0
    %993 = vmatpush1.msra.mxu0 %v72
    %994 = vmatprep.subr.mxu0 0.0
    %995 = vmatpush1.msra.mxu0 %v73
    %996 = vmatprep.subr.mxu0 0.0
    %997 = vmatpush1.msra.mxu0 %v74
    %998 = vmatprep.subr.mxu0 0.0
    %999 = vmatpush1.msra.mxu0 %v75
    %1000 = vmatprep.subr.mxu0 0.0
    %1001 = vmatpush1.msra.mxu0 %v76
    %1002 = vmatprep.subr.mxu0 0.0
    %1003 = vmatpush1.msra.mxu0 %v77
    %1004 = vmatprep.subr.mxu0 0.0
    %1005 = vmatpush1.msra.mxu0 %v78
    %1006 = vmatprep.subr.mxu0 0.0
    %1007 = vmatpush1.msra.mxu0 %v79
    %1008 = vmatprep.subr.mxu0 0.0
    %1009 = vmatpush1.msra.mxu0 %v80
    %1010 = vmatprep.subr.mxu0 0.0
    %1011 = vmatpush1.msra.mxu0 %v81
    %1012 = vmatprep.subr.mxu0 0.0
    %1013 = vmatpush1.msra.mxu0 %v82
    %1014 = vmatprep.subr.mxu0 0.0
    %1015 = vmatpush1.msra.mxu0 %v83
    %1016 = vmatprep.subr.mxu0 0.0
    %1017 = vmatpush1.msra.mxu0 %v84
    %1018 = vmatprep.subr.mxu0 0.0
    %1019 = vmatpush1.msra.mxu0 %v85
    %1020 = vmatprep.subr.mxu0 0.0
    %1021 = vmatpush1.msra.mxu0 %v86
    %1022 = vmatprep.subr.mxu0 0.0
    %1023 = vmatpush1.msra.mxu0 0.0
    %1024 = vmatprep.subr.mxu0 0.0
    %1025 = vmatpush1.msra.mxu0 0.0
    %1026 = vmatprep.subr.mxu0 0.0
    %1027 = vmatpush1.msra.mxu0 0.0
    %1028 = vmatprep.subr.mxu0 0.0
    %1029 = vmatpush1.msra.mxu0 0.0
    %1030 = vmatprep.subr.mxu0 0.0
    %1031 = vmatpush1.msra.mxu0 0.0
    %1032 = vmatprep.subr.mxu0 0.0
    %1033 = vmatpush1.msra.mxu0 0.0
    %1034 = vmatprep.subr.mxu0 0.0
    %1035 = vmatpush1.msra.mxu0 0.0
    %1036 = vmatprep.subr.mxu0 0.0
    %1037 = vmatpush1.msra.mxu0 0.0
    %1038 = vmatprep.subr.mxu0 0.0
    %1039 = vmatpush1.msra.mxu0 0.0
    %1040 = vmatprep.subr.mxu0 0.0
    %1041 = vmatpush1.msra.mxu0 0.0
    %1042 = vmatprep.subr.mxu0 0.0
    %1043 = vmatpush1.msra.mxu0 0.0
    %1044 = vmatprep.subr.mxu0 0.0
    %1045 = vmatpush1.msra.mxu0 0.0
    %1046 = vmatprep.subr.mxu0 0.0
    %1047 = vmatpush1.msra.mxu0 0.0
    %1048 = vmatprep.subr.mxu0 0.0
    %1049 = vmatpush1.msra.mxu0 0.0
    %1050 = vmatprep.subr.mxu0 0.0
    %1051 = vmatpush1.msra.mxu0 0.0
    %1052 = vmatprep.subr.mxu0 0.0
    %1053 = vmatpush1.msra.mxu0 0.0
    %1054 = vmatprep.mubr.f32.mxu0 0.0
    %1055 = vmatmul.mubr.f32.gmra.mrb[0].mxu0 %v915
    %v1056 = vpop.f32.mrb[0].mxu0
    %v1057 = vadd.f32 %v99, %v1056
    %v1058 = vpop.f32.mrb[0].mxu0
    %1059 = vdwg.mxu0
    %v1060 = vadd.f32 %v987, %v1057
    %v1061 = vxor.u32 %v1060, 2147483648
    %v1062 = vmul.f32 %v1061, 1.442695
    %v1063 = vpow.pop %v1062
    %v1064 = vadd.f32 %v1063, 1.0
    %v1065 = vrcp.pop %v1064
    %v1066 = vmul.f32 1.0, %v1065
    %1067 = vrot.lane.b32.xlu0 %v1066, 64
    %v1068 = vpop.permute.xlu0 %1067
    %v1069 = vmul.f32 %v1068, %v1057
    %v1070 = vadd.f32 %v987, %v1069
    %v1071 = vtanh.pop %v1070
    %1072 = vrot.lane.b32.xlu0 %v1071, 64
    %v1073 = vpop.permute.xlu0 %1072
    %1074 = vrot.lane.b32.xlu0 %v1066, 32
    %v1075 = vpop.permute.xlu0 %1074
    %v1076 = vsub.f32 %v915, %v1073
    %v1077 = vmul.f32 %v1075, %v1076
    %v1078 = vadd.f32 %v1073, %v1077
    %1079 = vrot.lane.b32.xlu0 %v66, 64
    %v1080 = vpop.permute.xlu0 %1079
    %v1081 = vsel %vm102, %v1080, 0
    %1083 = vmatprep.subr.mxu0 0.0
    %1084 = vmatpush1.msra.mxu0 %v67
    %1085 = vmatprep.subr.mxu0 0.0
    %1086 = vmatpush1.msra.mxu0 %v68
    %1087 = vmatprep.subr.mxu0 0.0
    %1088 = vmatpush1.msra.mxu0 %v69
    %1089 = vmatprep.subr.mxu0 0.0
    %1090 = vmatpush1.msra.mxu0 %v70
    %1091 = vmatprep.subr.mxu0 0.0
    %1092 = vmatpush1.msra.mxu0 0.0
    %1093 = vmatprep.subr.mxu0 0.0
    %1094 = vmatpush1.msra.mxu0 0.0
    %1095 = vmatprep.subr.mxu0 0.0
    %1096 = vmatpush1.msra.mxu0 0.0
    %1097 = vmatprep.subr.mxu0 0.0
    %1098 = vmatpush1.msra.mxu0 0.0
    %1099 = vmatprep.subr.mxu0 0.0
    %1100 = vmatpush1.msra.mxu0 0.0
    %1101 = vmatprep.subr.mxu0 0.0
    %1102 = vmatpush1.msra.mxu0 0.0
    %1103 = vmatprep.subr.mxu0 0.0
    %1104 = vmatpush1.msra.mxu0 0.0
    %1105 = vmatprep.subr.mxu0 0.0
    %1106 = vmatpush1.msra.mxu0 0.0
    %1107 = vmatprep.subr.mxu0 0.0
    %1108 = vmatpush1.msra.mxu0 0.0
    %1109 = vmatprep.subr.mxu0 0.0
    %1110 = vmatpush1.msra.mxu0 0.0
    %1111 = vmatprep.subr.mxu0 0.0
    %1112 = vmatpush1.msra.mxu0 0.0
    %1113 = vmatprep.subr.mxu0 0.0
    %1114 = vmatpush1.msra.mxu0 0.0
    %1115 = vmatprep.subr.mxu0 0.0
    %1116 = vmatpush1.msra.mxu0 0.0
    %1117 = vmatprep.subr.mxu0 0.0
    %1118 = vmatpush1.msra.mxu0 0.0
    %1119 = vmatprep.subr.mxu0 0.0
    %1120 = vmatpush1.msra.mxu0 0.0
    %1121 = vmatprep.subr.mxu0 0.0
    %1122 = vmatpush1.msra.mxu0 0.0
    %1123 = vmatprep.subr.mxu0 0.0
    %1124 = vmatpush1.msra.mxu0 0.0
    %1125 = vmatprep.subr.mxu0 0.0
    %1126 = vmatpush1.msra.mxu0 0.0
    %1127 = vmatprep.subr.mxu0 0.0
    %1128 = vmatpush1.msra.mxu0 0.0
    %1129 = vmatprep.subr.mxu0 0.0
    %1130 = vmatpush1.msra.mxu0 0.0
    %1131 = vmatprep.subr.mxu0 0.0
    %1132 = vmatpush1.msra.mxu0 0.0
    %1133 = vmatprep.subr.mxu0 0.0
    %1134 = vmatpush1.msra.mxu0 0.0
    %1135 = vmatprep.subr.mxu0 0.0
    %1136 = vmatpush1.msra.mxu0 0.0
    %1137 = vmatprep.subr.mxu0 0.0
    %1138 = vmatpush1.msra.mxu0 0.0
    %1139 = vmatprep.subr.mxu0 0.0
    %1140 = vmatpush1.msra.mxu0 0.0
    %1141 = vmatprep.subr.mxu0 0.0
    %1142 = vmatpush1.msra.mxu0 0.0
    %1143 = vmatprep.subr.mxu0 0.0
    %1144 = vmatpush1.msra.mxu0 0.0
    %1145 = vmatprep.subr.mxu0 0.0
    %1146 = vmatpush1.msra.mxu0 0.0
    %1147 = vmatprep.mubr.f32.mxu0 0.0
    %1148 = vmatmul.mubr.f32.gmra.mrb[0].mxu0 %v1081
    %v1149 = vpop.f32.mrb[0].mxu0
    %v1150 = vadd.f32 %v92, %v1149
    %v1151 = vpop.f32.mrb[0].mxu0
    %1152 = vdwg.mxu0
    %1153 = vmatprep.subr.mxu0 0.0
    %1154 = vmatpush1.msra.mxu0 %v71
    %1155 = vmatprep.subr.mxu0 0.0
    %1156 = vmatpush1.msra.mxu0 %v72
    %1157 = vmatprep.subr.mxu0 0.0
    %1158 = vmatpush1.msra.mxu0 %v73
    %1159 = vmatprep.subr.mxu0 0.0
    %1160 = vmatpush1.msra.mxu0 %v74
    %1161 = vmatprep.subr.mxu0 0.0
    %1162 = vmatpush1.msra.mxu0 %v75
    %1163 = vmatprep.subr.mxu0 0.0
    %1164 = vmatpush1.msra.mxu0 %v76
    %1165 = vmatprep.subr.mxu0 0.0
    %1166 = vmatpush1.msra.mxu0 %v77
    %1167 = vmatprep.subr.mxu0 0.0
    %1168 = vmatpush1.msra.mxu0 %v78
    %1169 = vmatprep.subr.mxu0 0.0
    %1170 = vmatpush1.msra.mxu0 %v79
    %1171 = vmatprep.subr.mxu0 0.0
    %1172 = vmatpush1.msra.mxu0 %v80
    %1173 = vmatprep.subr.mxu0 0.0
    %1174 = vmatpush1.msra.mxu0 %v81
    %1175 = vmatprep.subr.mxu0 0.0
    %1176 = vmatpush1.msra.mxu0 %v82
    %1177 = vmatprep.subr.mxu0 0.0
    %1178 = vmatpush1.msra.mxu0 %v83
    %1179 = vmatprep.subr.mxu0 0.0
    %1180 = vmatpush1.msra.mxu0 %v84
    %1181 = vmatprep.subr.mxu0 0.0
    %1182 = vmatpush1.msra.mxu0 %v85
    %1183 = vmatprep.subr.mxu0 0.0
    %1184 = vmatpush1.msra.mxu0 %v86
    %1185 = vmatprep.subr.mxu0 0.0
    %1186 = vmatpush1.msra.mxu0 0.0
    %1187 = vmatprep.subr.mxu0 0.0
    %1188 = vmatpush1.msra.mxu0 0.0
    %1189 = vmatprep.subr.mxu0 0.0
    %1190 = vmatpush1.msra.mxu0 0.0
    %1191 = vmatprep.subr.mxu0 0.0
    %1192 = vmatpush1.msra.mxu0 0.0
    %1193 = vmatprep.subr.mxu0 0.0
    %1194 = vmatpush1.msra.mxu0 0.0
    %1195 = vmatprep.subr.mxu0 0.0
    %1196 = vmatpush1.msra.mxu0 0.0
    %1197 = vmatprep.subr.mxu0 0.0
    %1198 = vmatpush1.msra.mxu0 0.0
    %1199 = vmatprep.subr.mxu0 0.0
    %1200 = vmatpush1.msra.mxu0 0.0
    %1201 = vmatprep.subr.mxu0 0.0
    %1202 = vmatpush1.msra.mxu0 0.0
    %1203 = vmatprep.subr.mxu0 0.0
    %1204 = vmatpush1.msra.mxu0 0.0
    %1205 = vmatprep.subr.mxu0 0.0
    %1206 = vmatpush1.msra.mxu0 0.0
    %1207 = vmatprep.subr.mxu0 0.0
    %1208 = vmatpush1.msra.mxu0 0.0
    %1209 = vmatprep.subr.mxu0 0.0
    %1210 = vmatpush1.msra.mxu0 0.0
    %1211 = vmatprep.subr.mxu0 0.0
    %1212 = vmatpush1.msra.mxu0 0.0
    %1213 = vmatprep.subr.mxu0 0.0
    %1214 = vmatpush1.msra.mxu0 0.0
    %1215 = vmatprep.subr.mxu0 0.0
    %1216 = vmatpush1.msra.mxu0 0.0
    %1217 = vmatprep.mubr.f32.mxu0 0.0
    %1218 = vmatmul.mubr.f32.gmra.mrb[0].mxu0 %v1078
    %v1219 = vpop.f32.mrb[0].mxu0
    %v1220 = vadd.f32 %v99, %v1219
    %v1221 = vpop.f32.mrb[0].mxu0
    %1222 = vdwg.mxu0
    %v1223 = vadd.f32 %v1150, %v1220
    %v1224 = vxor.u32 %v1223, 2147483648
    %v1225 = vmul.f32 %v1224, 1.442695
    %v1226 = vpow.pop %v1225
    %v1227 = vadd.f32 %v1226, 1.0
    %v1228 = vrcp.pop %v1227
    %v1229 = vmul.f32 1.0, %v1228
    %1230 = vrot.lane.b32.xlu0 %v1229, 64
    %v1231 = vpop.permute.xlu0 %1230
    %v1232 = vmul.f32 %v1231, %v1220
    %v1233 = vadd.f32 %v1150, %v1232
    %v1234 = vtanh.pop %v1233
    %1235 = vrot.lane.b32.xlu0 %v1234, 64
    %v1236 = vpop.permute.xlu0 %1235
    %1237 = vrot.lane.b32.xlu0 %v1229, 32
    %v1238 = vpop.permute.xlu0 %1237
    %v1239 = vsub.f32 %v1078, %v1236
    %v1240 = vmul.f32 %v1238, %v1239
    %v1241 = vadd.f32 %v1236, %v1240
    %1242 = vrot.lane.b32.xlu0 %v66, 32
    %v1243 = vpop.permute.xlu0 %1242
    %v1244 = vsel %vm102, %v1243, 0
    %1246 = vmatprep.subr.mxu0 0.0
    %1247 = vmatpush1.msra.mxu0 %v67
    %1248 = vmatprep.subr.mxu0 0.0
    %1249 = vmatpush1.msra.mxu0 %v68
    %1250 = vmatprep.subr.mxu0 0.0
    %1251 = vmatpush1.msra.mxu0 %v69
    %1252 = vmatprep.subr.mxu0 0.0
    %1253 = vmatpush1.msra.mxu0 %v70
    %1254 = vmatprep.subr.mxu0 0.0
    %1255 = vmatpush1.msra.mxu0 0.0
    %1256 = vmatprep.subr.mxu0 0.0
    %1257 = vmatpush1.msra.mxu0 0.0
    %1258 = vmatprep.subr.mxu0 0.0
    %1259 = vmatpush1.msra.mxu0 0.0
    %1260 = vmatprep.subr.mxu0 0.0
    %1261 = vmatpush1.msra.mxu0 0.0
    %1262 = vmatprep.subr.mxu0 0.0
    %1263 = vmatpush1.msra.mxu0 0.0
    %1264 = vmatprep.subr.mxu0 0.0
    %1265 = vmatpush1.msra.mxu0 0.0
    %1266 = vmatprep.subr.mxu0 0.0
    %1267 = vmatpush1.msra.mxu0 0.0
    %1268 = vmatprep.subr.mxu0 0.0
    %1269 = vmatpush1.msra.mxu0 0.0
    %1270 = vmatprep.subr.mxu0 0.0
    %1271 = vmatpush1.msra.mxu0 0.0
    %1272 = vmatprep.subr.mxu0 0.0
    %1273 = vmatpush1.msra.mxu0 0.0
    %1274 = vmatprep.subr.mxu0 0.0
    %1275 = vmatpush1.msra.mxu0 0.0
    %1276 = vmatprep.subr.mxu0 0.0
    %1277 = vmatpush1.msra.mxu0 0.0
    %1278 = vmatprep.subr.mxu0 0.0
    %1279 = vmatpush1.msra.mxu0 0.0
    %1280 = vmatprep.subr.mxu0 0.0
    %1281 = vmatpush1.msra.mxu0 0.0
    %1282 = vmatprep.subr.mxu0 0.0
    %1283 = vmatpush1.msra.mxu0 0.0
    %1284 = vmatprep.subr.mxu0 0.0
    %1285 = vmatpush1.msra.mxu0 0.0
    %1286 = vmatprep.subr.mxu0 0.0
    %1287 = vmatpush1.msra.mxu0 0.0
    %1288 = vmatprep.subr.mxu0 0.0
    %1289 = vmatpush1.msra.mxu0 0.0
    %1290 = vmatprep.subr.mxu0 0.0
    %1291 = vmatpush1.msra.mxu0 0.0
    %1292 = vmatprep.subr.mxu0 0.0
    %1293 = vmatpush1.msra.mxu0 0.0
    %1294 = vmatprep.subr.mxu0 0.0
    %1295 = vmatpush1.msra.mxu0 0.0
    %1296 = vmatprep.subr.mxu0 0.0
    %1297 = vmatpush1.msra.mxu0 0.0
    %1298 = vmatprep.subr.mxu0 0.0
    %1299 = vmatpush1.msra.mxu0 0.0
    %1300 = vmatprep.subr.mxu0 0.0
    %1301 = vmatpush1.msra.mxu0 0.0
    %1302 = vmatprep.subr.mxu0 0.0
    %1303 = vmatpush1.msra.mxu0 0.0
    %1304 = vmatprep.subr.mxu0 0.0
    %1305 = vmatpush1.msra.mxu0 0.0
    %1306 = vmatprep.subr.mxu0 0.0
    %1307 = vmatpush1.msra.mxu0 0.0
    %1308 = vmatprep.subr.mxu0 0.0
    %1309 = vmatpush1.msra.mxu0 0.0
    %1310 = vmatprep.mubr.f32.mxu0 0.0
    %1311 = vmatmul.mubr.f32.gmra.mrb[0].mxu0 %v1244
    %v1312 = vpop.f32.mrb[0].mxu0
    %v1313 = vadd.f32 %v92, %v1312
    %v1314 = vpop.f32.mrb[0].mxu0
    %1315 = vdwg.mxu0
    %1316 = vmatprep.subr.mxu0 0.0
    %1317 = vmatpush1.msra.mxu0 %v71
    %1318 = vmatprep.subr.mxu0 0.0
    %1319 = vmatpush1.msra.mxu0 %v72
    %1320 = vmatprep.subr.mxu0 0.0
    %1321 = vmatpush1.msra.mxu0 %v73
    %1322 = vmatprep.subr.mxu0 0.0
    %1323 = vmatpush1.msra.mxu0 %v74
    %1324 = vmatprep.subr.mxu0 0.0
    %1325 = vmatpush1.msra.mxu0 %v75
    %1326 = vmatprep.subr.mxu0 0.0
    %1327 = vmatpush1.msra.mxu0 %v76
    %1328 = vmatprep.subr.mxu0 0.0
    %1329 = vmatpush1.msra.mxu0 %v77
    %1330 = vmatprep.subr.mxu0 0.0
    %1331 = vmatpush1.msra.mxu0 %v78
    %1332 = vmatprep.subr.mxu0 0.0
    %1333 = vmatpush1.msra.mxu0 %v79
    %1334 = vmatprep.subr.mxu0 0.0
    %1335 = vmatpush1.msra.mxu0 %v80
    %1336 = vmatprep.subr.mxu0 0.0
    %1337 = vmatpush1.msra.mxu0 %v81
    %1338 = vmatprep.subr.mxu0 0.0
    %1339 = vmatpush1.msra.mxu0 %v82
    %1340 = vmatprep.subr.mxu0 0.0
    %1341 = vmatpush1.msra.mxu0 %v83
    %1342 = vmatprep.subr.mxu0 0.0
    %1343 = vmatpush1.msra.mxu0 %v84
    %1344 = vmatprep.subr.mxu0 0.0
    %1345 = vmatpush1.msra.mxu0 %v85
    %1346 = vmatprep.subr.mxu0 0.0
    %1347 = vmatpush1.msra.mxu0 %v86
    %1348 = vmatprep.subr.mxu0 0.0
    %1349 = vmatpush1.msra.mxu0 0.0
    %1350 = vmatprep.subr.mxu0 0.0
    %1351 = vmatpush1.msra.mxu0 0.0
    %1352 = vmatprep.subr.mxu0 0.0
    %1353 = vmatpush1.msra.mxu0 0.0
    %1354 = vmatprep.subr.mxu0 0.0
    %1355 = vmatpush1.msra.mxu0 0.0
    %1356 = vmatprep.subr.mxu0 0.0
    %1357 = vmatpush1.msra.mxu0 0.0
    %1358 = vmatprep.subr.mxu0 0.0
    %1359 = vmatpush1.msra.mxu0 0.0
    %1360 = vmatprep.subr.mxu0 0.0
    %1361 = vmatpush1.msra.mxu0 0.0
    %1362 = vmatprep.subr.mxu0 0.0
    %1363 = vmatpush1.msra.mxu0 0.0
    %1364 = vmatprep.subr.mxu0 0.0
    %1365 = vmatpush1.msra.mxu0 0.0
    %1366 = vmatprep.subr.mxu0 0.0
    %1367 = vmatpush1.msra.mxu0 0.0
    %1368 = vmatprep.subr.mxu0 0.0
    %1369 = vmatpush1.msra.mxu0 0.0
    %1370 = vmatprep.subr.mxu0 0.0
    %1371 = vmatpush1.msra.mxu0 0.0
    %1372 = vmatprep.subr.mxu0 0.0
    %1373 = vmatpush1.msra.mxu0 0.0
    %1374 = vmatprep.subr.mxu0 0.0
    %1375 = vmatpush1.msra.mxu0 0.0
    %1376 = vmatprep.subr.mxu0 0.0
    %1377 = vmatpush1.msra.mxu0 0.0
    %1378 = vmatprep.subr.mxu0 0.0
    %1379 = vmatpush1.msra.mxu0 0.0
    %1380 = vmatprep.mubr.f32.mxu0 0.0
    %1381 = vmatmul.mubr.f32.gmra.mrb[0].mxu0 %v1241
    %v1382 = vpop.f32.mrb[0].mxu0
    %v1383 = vadd.f32 %v99, %v1382
    %v1384 = vpop.f32.mrb[0].mxu0
    %1385 = vdwg.mxu0
    %v1386 = vadd.f32 %v1313, %v1383
    %v1387 = vxor.u32 %v1386, 2147483648
    %v1388 = vmul.f32 %v1387, 1.442695
    %v1389 = vpow.pop %v1388
    %v1390 = vadd.f32 %v1389, 1.0
    %v1391 = vrcp.pop %v1390
    %v1392 = vmul.f32 1.0, %v1391
    %1393 = vrot.lane.b32.xlu0 %v1392, 64
    %v1394 = vpop.permute.xlu0 %1393
    %v1395 = vmul.f32 %v1394, %v1383
    %v1396 = vadd.f32 %v1313, %v1395
    %v1397 = vtanh.pop %v1396
    %1398 = vrot.lane.b32.xlu0 %v1397, 64
    %v1399 = vpop.permute.xlu0 %1398
    %1400 = vrot.lane.b32.xlu0 %v1392, 32
    %v1401 = vpop.permute.xlu0 %1400
    %v1402 = vsub.f32 %v1241, %v1399
    %v1403 = vmul.f32 %v1401, %v1402
    %v1404 = vadd.f32 %v1399, %v1403
    %1405 = vst [vmem:[#allocation8] sm:$0xff] %v1404
    // Predicated region
    $region38: #{tpu_custom_call.1} parent=1 // pred_check
      _
    $region39: #{tpu_custom_call.1} parent=1 // pred_check_branch
      %1407 = sbr.rel (0) target = $region41
    $region40: #{tpu_custom_call.1} parent=1 // pred_region
      %s1409 = ssub.s32 128, 128
      %1410 = vsyncadd [#allocation4], %s1409
      %s1412 = sshll.u32 [#allocation8], 4
      %s1413 = int_to_ptr.vmem [resolvable:$true] %s1412
      %1415 = dma.vmem_to_hbm [thread:$0]  %s1413, 128, %s5, [#allocation4]
    $region41: #{tpu_custom_call.1} parent=1 // pred_fallthru
      _
    // Predicated region
    $region42: #{tpu_custom_call.1} parent=1 // pred_check
      _
    $region43: #{tpu_custom_call.1} parent=1 // pred_check_branch
      %1417 = sbr.rel (0) target = $region45
    $region44: #{tpu_custom_call.1} parent=1 // pred_region
      %1418 = dma.done [#allocation4], 128
    $region45: #{tpu_custom_call.1} parent=1 // pred_fallthru
      _
    %1419 = vsyncpa [#allocation3], 1
    %1420 = vsyncpa [#allocation6], 1
    %1421 = vsyncpa [#allocation4], 1

</llo_original>
